<compile_context>
chip_gen: v7x
topology: tpu7x:2x2x1
jax: 0.10.0
libtpu: 0.0.40
codegen_flags: <defaults>
</compile_context>

<pallas_src>
import functools
import math

import jax
import jax.numpy as jnp
from jax.experimental import pallas as pl
from jax.experimental.pallas import tpu as pltpu

LANE = 128
SUBLANE = 8
MIB = 1024 * 1024


def _round_up(n, m):
    return ((n + m - 1) // m) * m


def _pick_tile(n, pref, align):
    """Largest tile <= pref that is a multiple of `align` and divides n (n % align == 0)."""
    if n <= pref:
        return n
    t = (pref // align) * align
    while n % t != 0:
        t -= align
    return t


def _vmem_limit(nbytes):
    # Real footprint + generous margin; capped well below v7x's 64 MiB per TensorCore.
    return int(min(48 * MIB, max(8 * MIB, 2 * nbytes)))


# ---------------------------------------------------------------------------
# Kernel 1: fused LSTMCell recurrence, TT time steps per grid iteration.
# ---------------------------------------------------------------------------
def lstm_recurrence_kernel(x_ref,      # VMEM [TT, B, Ep] f32  pipelined embeddings
                           wx_ref,     # VMEM [Ep, 4*Hp]  f32  W_ih^T (gate-grouped, padded)
                           wh_ref,     # VMEM [Hp, 4*Hp]  f32  W_hh^T (gate-grouped, padded)
                           b_ref,      # VMEM [1, 4*Hp]   f32  b_ih + b_hh
                           h0_ref,     # VMEM [B, Hp]     f32
                           c0_ref,     # VMEM [B, Hp]     f32
                           hseq_ref,   # VMEM [TT*B, Hp]  bf16 per-step hidden states
                           h_ref,      # VMEM [B, Hp]     f32  carried state (resident)
                           c_ref,      # VMEM [B, Hp]     f32  carried state (resident)
                           *, tt, t_total):
    i = pl.program_id(0)

    @pl.when(i == 0)
    def _init_state():
        h_ref[...] = h0_ref[...]
        c_ref[...] = c0_ref[...]

    B, Hp = h_ref.shape
    for j in range(tt):                          # statically unrolled time steps
        @pl.when(i * tt + j < t_total)           # mask padded tail steps
        def _step(j=j):
            # Two f32 matmuls (no per-step concat / transpose); f32 accumulate.
            gates = (jnp.dot(x_ref[j], wx_ref[...],
                             preferred_element_type=jnp.float32)
                     + jnp.dot(h_ref[...], wh_ref[...],
                               preferred_element_type=jnp.float32)
                     + b_ref[...])                                   # [B, 4*Hp]
            i_g = jax.nn.sigmoid(gates[:, 0 * Hp:1 * Hp])
            f_g = jax.nn.sigmoid(gates[:, 1 * Hp:2 * Hp])
            g_g = jnp.tanh(gates[:, 2 * Hp:3 * Hp])
            o_g = jax.nn.sigmoid(gates[:, 3 * Hp:4 * Hp])
            c_new = f_g * c_ref[...] + i_g * g_g
            c_ref[...] = c_new
            h_ref[...] = o_g * jnp.tanh(c_new)
        # h cast to bf16 once per step here; reused by the whole vocab projection kernel.
        hseq_ref[pl.ds(j * B, B), :] = h_ref[...].astype(hseq_ref.dtype)


# ---------------------------------------------------------------------------
# Kernel 2: batched vocab projection  [(T*B), Hp] x [Hp, Vp] + b.
# ---------------------------------------------------------------------------
def vocab_projection_kernel(h_ref, w_ref, b_ref, o_ref):
    o_ref[...] = (jnp.dot(h_ref[...], w_ref[...],
                          preferred_element_type=jnp.float32) + b_ref[...])


# ---------------------------------------------------------------------------
# One-time parameter layout transform (PyTorch layout -> kernel layout).
# ---------------------------------------------------------------------------
def prepare_params(params):
    embed = params["embed"].astype(jnp.float32)            # [V, E]
    w_ih, w_hh = params["w_ih"], params["w_hh"]            # [4H, E], [4H, H]
    b_ih, b_hh = params["b_ih"], params["b_hh"]            # [4H], [4H]
    w_fc, b_fc = params["w_fc"], params["b_fc"]            # [V, H], [V]

    V, E = embed.shape
    H = w_hh.shape[1]
    Ep = _round_up(E, LANE)
    Hp = _round_up(H, LANE)
    Vp = _round_up(V, LANE)

    embed_p = jnp.zeros((V, Ep), jnp.float32).at[:, :E].set(embed)

    # Gate-grouped, pre-transposed, lane-padded recurrence weights (kept f32: the
    # recurrence gate path stays f32 to avoid bf16 drift over long decodes).
    w_x = jnp.zeros((Ep, 4 * Hp), jnp.float32)
    w_h = jnp.zeros((Hp, 4 * Hp), jnp.float32)
    b_g = jnp.zeros((1, 4 * Hp), jnp.float32)
    for g in range(4):
        w_x = w_x.at[:E, g * Hp:g * Hp + H].set(w_ih[g * H:(g + 1) * H, :].T)
        w_h = w_h.at[:H, g * Hp:g * Hp + H].set(w_hh[g * H:(g + 1) * H, :].T)
        b_g = b_g.at[0, g * Hp:g * Hp + H].set(
            b_ih[g * H:(g + 1) * H] + b_hh[g * H:(g + 1) * H])

    # Projection weights in bf16 (f32 accumulate in-kernel).
    w_fc_p = jnp.zeros((Hp, Vp), jnp.float32).at[:H, :V].set(w_fc.T)
    b_fc_p = jnp.zeros((1, Vp), jnp.float32).at[0, :V].set(b_fc)

    return {
        "embed": embed_p,
        "w_x": w_x, "w_h": w_h, "b_g": b_g,
        "w_fc": w_fc_p.astype(jnp.bfloat16), "b_fc": b_fc_p,
        "E": E, "Ep": Ep, "H": H, "Hp": Hp, "V": V, "Vp": Vp,
    }


# ---------------------------------------------------------------------------
# Multi-step fused decode + single-step forward.
# ---------------------------------------------------------------------------
def lstm_generator_scan(characters, kparams, hc_states=None, *,
                        time_tile=8, vocab_tile=512, m_tile=256):
    """characters: int32 [T, B].  Returns (logits [T, B, V], (h_T [B, H], c_T [B, H]))."""
    characters = characters.astype(jnp.int32)
    T, B = characters.shape
    Ep, H, Hp, V, Vp = (kparams[k] for k in ("Ep", "H", "Hp", "V", "Vp"))

    # Time unroll factor: TT*B must be a sublane (8) multiple for dense h stores.
    tt = max(1, min(time_tile, T))
    tt = _round_up(tt, SUBLANE // math.gcd(B, SUBLANE))
    nt = (T + tt - 1) // tt
    t_pad = nt * tt

    # Embedding gather hoisted out of the kernel (XLA gather); clamp ids so an
    # out-of-range id cannot trigger unchecked OOB VMEM reads (nn.Embedding would raise).
    ids = jnp.clip(characters, 0, V - 1)
    x_all = jnp.take(kparams["embed"], ids, axis=0)                  # [T, B, Ep] f32
    if t_pad != T:
        x_all = jnp.zeros((t_pad, B, Ep), jnp.float32).at[:T].set(x_all)

    if hc_states is None:
        h0 = jnp.zeros((B, Hp), jnp.float32)
        c0 = jnp.zeros((B, Hp), jnp.float32)
    else:
        h, c = hc_states
        h0 = jnp.zeros((B, Hp), jnp.float32).at[:, :H].set(h.astype(jnp.float32))
        c0 = jnp.zeros((B, Hp), jnp.float32).at[:, :H].set(c.astype(jnp.float32))

    const2 = lambda i: (0, 0)
    # Constant-index resident inputs: single VMEM buffer instead of the default two.
    resident = functools.partial(pl.BlockSpec, pipeline_mode=pl.Buffered(1))

    # ----- kernel 1: recurrence ---------------------------------------------------------
    rec_vmem = (2 * tt * B * Ep * 4                                    # x (double-buffered)
                + (Ep + Hp) * 4 * Hp * 4 + 4 * Hp * 4                  # resident weights
                + 2 * B * Hp * 4                                       # h0, c0
                + 2 * tt * B * Hp * 2                                  # hseq out
                + 2 * 2 * B * Hp * 4)                                  # carried h, c

    hseq, h1, c1 = pl.pallas_call(
        functools.partial(lstm_recurrence_kernel, tt=tt, t_total=T),
        out_shape=(
            jax.ShapeDtypeStruct((t_pad * B, Hp), jnp.bfloat16),       # per-step h (proj LHS)
            jax.ShapeDtypeStruct((B, Hp), jnp.float32),                # h_T
            jax.ShapeDtypeStruct((B, Hp), jnp.float32),                # c_T
        ),
        grid_spec=pltpu.PrefetchScalarGridSpec(
            num_scalar_prefetch=0,
            grid=(nt,),
            in_specs=[
                pl.BlockSpec((tt, B, Ep), lambda i: (i, 0, 0)),        # x tile (pipelined)
                resident((Ep, 4 * Hp), const2),                        # W_x
                resident((Hp, 4 * Hp), const2),                        # W_h
                resident((1, 4 * Hp), const2),                         # bias
                resident((B, Hp), const2),                             # h0
                resident((B, Hp), const2),                             # c0
            ],
            out_specs=[
                pl.BlockSpec((tt * B, Hp), lambda i: (i, 0)),          # hseq
                pl.BlockSpec((B, Hp), const2),                         # carried h
                pl.BlockSpec((B, Hp), const2),                         # carried c
            ],
        ),
        compiler_params=pltpu.CompilerParams(
            dimension_semantics=("arbitrary",),        # time recurrence: cannot be split
            vmem_limit_bytes=_vmem_limit(rec_vmem),
        ),
    )(x_all, kparams["w_x"], kparams["w_h"], kparams["b_g"], h0, c0)

    # ----- kernel 2: vocab projection, one pass over W_fc, megacore-parallel -------------
    M = t_pad * B                                      # multiple of 8 by construction
    tm = _pick_tile(M, m_tile, SUBLANE)
    tn = _pick_tile(Vp, max(vocab_tile, LANE), LANE)
    proj_vmem = 2 * (tm * Hp * 2 + Hp * tn * 2 + tn * 4 + tm * tn * 4)

    logits_p = pl.pallas_call(
        vocab_projection_kernel,
        out_shape=jax.ShapeDtypeStruct((M, Vp), jnp.float32),
        grid_spec=pltpu.PrefetchScalarGridSpec(
            num_scalar_prefetch=0,
            grid=(M // tm, Vp // tn),
            in_specs=[
                pl.BlockSpec((tm, Hp), lambda i, j: (i, 0)),
                pl.BlockSpec((Hp, tn), lambda i, j: (0, j)),
                pl.BlockSpec((1, tn), lambda i, j: (0, j)),
            ],
            out_specs=pl.BlockSpec((tm, tn), lambda i, j: (i, j)),
        ),
        compiler_params=pltpu.CompilerParams(
            dimension_semantics=("parallel", "parallel"),  # shard across TCs on v7x
            vmem_limit_bytes=_vmem_limit(proj_vmem),
        ),
    )(hseq, kparams["w_fc"], kparams["b_fc"])

    logits = logits_p.reshape(t_pad, B, Vp)[:T, :, :V]
    return logits, (h1[:, :H], c1[:, :H])


def lstm_generator_forward(character, kparams, hc_states=None):
    """Single-step forward, matching LSTMGenerator.forward semantics."""
    logits_seq, hc = lstm_generator_scan(character[None, :], kparams, hc_states,
                                         time_tile=1)
    return logits_seq[0], hc


# ---------------------------------------------------------------------------
# Pure-JAX reference (PyTorch LSTMCell semantics, f32) and parameter init.
# ---------------------------------------------------------------------------
def init_params(key, vocab_size, embed_size, hidden_size):
    ks = jax.random.split(key, 7)
    scale = 0.1
    return {
        "embed": scale * jax.random.normal(ks[0], (vocab_size, embed_size), jnp.float32),
        "w_ih": scale * jax.random.normal(ks[1], (4 * hidden_size, embed_size), jnp.float32),
        "w_hh": scale * jax.random.normal(ks[2], (4 * hidden_size, hidden_size), jnp.float32),
        "b_ih": scale * jax.random.normal(ks[3], (4 * hidden_size,), jnp.float32),
        "b_hh": scale * jax.random.normal(ks[4], (4 * hidden_size,), jnp.float32),
        "w_fc": scale * jax.random.normal(ks[5], (vocab_size, hidden_size), jnp.float32),
        "b_fc": scale * jax.random.normal(ks[6], (vocab_size,), jnp.float32),
    }


def reference_forward(character, params, hc_states=None):
    x = jnp.take(params["embed"], character, axis=0)
    B = x.shape[0]
    H = params["w_hh"].shape[1]
    if hc_states is None:
        h = jnp.zeros((B, H), jnp.float32)
        c = jnp.zeros((B, H), jnp.float32)
    else:
        h, c = hc_states
    gates = (x @ params["w_ih"].T + h @ params["w_hh"].T
             + params["b_ih"] + params["b_hh"])
    i = jax.nn.sigmoid(gates[:, 0 * H:1 * H])
    f = jax.nn.sigmoid(gates[:, 1 * H:2 * H])
    g = jnp.tanh(gates[:, 2 * H:3 * H])
    o = jax.nn.sigmoid(gates[:, 3 * H:4 * H])
    c = f * c + i * g
    h = o * jnp.tanh(c)
    logits = h @ params["w_fc"].T + params["b_fc"]
    return logits, (h, c)


def reference_scan(characters, params, hc_states=None):
    hc = hc_states
    outs = []
    for t in range(characters.shape[0]):
        lg, hc = reference_forward(characters[t], params, hc)
        outs.append(lg)
    return jnp.stack(outs, axis=0), hc


# TODO(synk): loss_func (cross_entropy) is not part of the forward pass and is left to XLA.

if __name__ == "__main__":
    VOCAB, EMBED, HIDDEN, BATCH, STEPS = 64, 16, 32, 2, 8

    key = jax.random.PRNGKey(0)
    k_params, k_char, k_h, k_c = jax.random.split(key, 4)

    params = init_params(k_params, VOCAB, EMBED, HIDDEN)
    kparams = prepare_params(params)

    chars_seq = jax.random.randint(k_char, (STEPS, BATCH), 0, VOCAB, dtype=jnp.int32)
    h0 = 0.1 * jax.random.normal(k_h, (BATCH, HIDDEN), jnp.float32)
    c0 = 0.1 * jax.random.normal(k_c, (BATCH, HIDDEN), jnp.float32)

    # 1) Single step (exact module forward), default zero states.
    logits1, (h1, c1) = lstm_generator_forward(chars_seq[0], kparams, hc_states=None)
    ref_logits1, (ref_h1, ref_c1) = reference_forward(chars_seq[0], params, None)

    # 2) Fused multi-step decode with explicit initial states.
    logits_seq, (hT, cT) = lstm_generator_scan(chars_seq, kparams, hc_states=(h0, c0))
    ref_logits_seq, (ref_hT, ref_cT) = reference_scan(chars_seq, params, (h0, c0))

    jax.block_until_ready((logits1, h1, c1, logits_seq, hT, cT))

    assert logits1.shape == (BATCH, VOCAB)
    assert logits_seq.shape == (STEPS, BATCH, VOCAB)
    assert hT.shape == (BATCH, HIDDEN) and cT.shape == (BATCH, HIDDEN)

    # Gate path is f32; only the vocab projection uses bf16 inputs (f32 accumulate).
    checks = ((logits1, ref_logits1), (h1, ref_h1), (c1, ref_c1),
              (logits_seq, ref_logits_seq), (hT, ref_hT), (cT, ref_cT))
    for got, want in checks:
        err = float(jnp.max(jnp.abs(got - want)))
        assert jnp.allclose(got, want, atol=2e-2, rtol=2e-2), err

    print("KERNEL_OK")
</pallas_src>

<mosaic_0001>
module attributes {stable_mosaic.version = 11 : i64} {
  func.func @lstm_recurrence_kernel(%arg0: i32, %arg1: memref<4x2x128xf32, #tpu.memory_space<vmem>>, %arg2: memref<128x512xf32, #tpu.memory_space<vmem>>, %arg3: memref<128x512xf32, #tpu.memory_space<vmem>>, %arg4: memref<1x512xf32, #tpu.memory_space<vmem>>, %arg5: memref<2x128xf32, #tpu.memory_space<vmem>>, %arg6: memref<2x128xf32, #tpu.memory_space<vmem>>, %arg7: memref<8x128xbf16, #tpu.memory_space<vmem>>, %arg8: memref<2x128xf32, #tpu.memory_space<vmem>>, %arg9: memref<2x128xf32, #tpu.memory_space<vmem>>) attributes {dimension_semantics = [#tpu.dimension_semantics<arbitrary>], iteration_bounds = array<i64: 1>, scalar_prefetch = 0 : i64, scratch_operands = 0 : i64, tpu.core_type = #tpu.core_type<tc>, window_params = [{transform_indices = @transform_0, window_bounds = array<i64: 4, 2, 128>}, {pipeline_mode = #tpu.pipeline_mode<synchronous>, transform_indices = @transform_1, window_bounds = array<i64: 128, 512>}, {pipeline_mode = #tpu.pipeline_mode<synchronous>, transform_indices = @transform_2, window_bounds = array<i64: 128, 512>}, {pipeline_mode = #tpu.pipeline_mode<synchronous>, transform_indices = @transform_3, window_bounds = array<i64: 1, 512>}, {pipeline_mode = #tpu.pipeline_mode<synchronous>, transform_indices = @transform_4, window_bounds = array<i64: 2, 128>}, {pipeline_mode = #tpu.pipeline_mode<synchronous>, transform_indices = @transform_5, window_bounds = array<i64: 2, 128>}, {transform_indices = @transform_6, window_bounds = array<i64: 8, 128>}, {pipeline_mode = #tpu.pipeline_mode<synchronous>, transform_indices = @transform_7, window_bounds = array<i64: 2, 128>}, {pipeline_mode = #tpu.pipeline_mode<synchronous>, transform_indices = @transform_8, window_bounds = array<i64: 2, 128>}]} {
    %c0_i32 = arith.constant 0 : i32
    %0 = arith.cmpi eq, %arg0, %c0_i32 : i32
    %1 = arith.extui %0 : i1 to i32
    %c0_i32_0 = arith.constant 0 : i32
    %2 = arith.cmpi ne, %1, %c0_i32_0 : i32
    scf.if %2 {
      %c0_25 = arith.constant 0 : index
      %c0_26 = arith.constant 0 : index
      %35 = vector.load %arg5[%c0_25, %c0_26] : memref<2x128xf32, #tpu.memory_space<vmem>>, vector<2x128xf32>
      %c0_27 = arith.constant 0 : index
      %c0_28 = arith.constant 0 : index
      %36 = vector.load %arg8[%c0_27, %c0_28] : memref<2x128xf32, #tpu.memory_space<vmem>>, vector<2x128xf32>
      tpu.vector_store %arg8[%c0_27, %c0_28], %35 {strides = array<i32>} : memref<2x128xf32, #tpu.memory_space<vmem>>, vector<2x128xf32>,
      %c0_29 = arith.constant 0 : index
      %c0_30 = arith.constant 0 : index
      %37 = vector.load %arg6[%c0_29, %c0_30] : memref<2x128xf32, #tpu.memory_space<vmem>>, vector<2x128xf32>
      %c0_31 = arith.constant 0 : index
      %c0_32 = arith.constant 0 : index
      %38 = vector.load %arg9[%c0_31, %c0_32] : memref<2x128xf32, #tpu.memory_space<vmem>>, vector<2x128xf32>
      tpu.vector_store %arg9[%c0_31, %c0_32], %37 {strides = array<i32>} : memref<2x128xf32, #tpu.memory_space<vmem>>, vector<2x128xf32>,
    } else {
    }
    %c4_i32 = arith.constant 4 : i32
    %3 = arith.muli %arg0, %c4_i32 : i32
    %c0_i32_1 = arith.constant 0 : i32
    %4 = arith.addi %3, %c0_i32_1 : i32
    %c1_i32 = arith.constant 1 : i32
    %5 = arith.cmpi slt, %4, %c1_i32 : i32
    %6 = arith.extui %5 : i1 to i32
    %c0_i32_2 = arith.constant 0 : i32
    %7 = arith.cmpi ne, %6, %c0_i32_2 : i32
    scf.if %7 {
      %c0_25 = arith.constant 0 : index
      %c0_26 = arith.constant 0 : index
      %c0_27 = arith.constant 0 : index
      %35 = vector.load %arg1[%c0_25, %c0_26, %c0_27] : memref<4x2x128xf32, #tpu.memory_space<vmem>>, vector<1x2x128xf32>
      %36 = vector.shape_cast %35 : vector<1x2x128xf32> to vector<2x128xf32>
      %c0_28 = arith.constant 0 : index
      %c0_29 = arith.constant 0 : index
      %37 = vector.load %arg2[%c0_28, %c0_29] : memref<128x512xf32, #tpu.memory_space<vmem>>, vector<128x512xf32>
      %cst = arith.constant dense<0.000000e+00> : vector<2x512xf32>
      %38 = tpu.matmul %36, %37, %cst {dimension_numbers = #tpu.dot_dimension_numbers<[1], [0], [0], [1], [0, 0, 1, 1], [], []>} : vector<2x128xf32>, vector<128x512xf32>, vector<2x512xf32> -> vector<2x512xf32>
      %c0_30 = arith.constant 0 : index
      %c0_31 = arith.constant 0 : index
      %39 = vector.load %arg8[%c0_30, %c0_31] : memref<2x128xf32, #tpu.memory_space<vmem>>, vector<2x128xf32>
      %c0_32 = arith.constant 0 : index
      %c0_33 = arith.constant 0 : index
      %40 = vector.load %arg3[%c0_32, %c0_33] : memref<128x512xf32, #tpu.memory_space<vmem>>, vector<128x512xf32>
      %cst_34 = arith.constant dense<0.000000e+00> : vector<2x512xf32>
      %41 = tpu.matmul %39, %40, %cst_34 {dimension_numbers = #tpu.dot_dimension_numbers<[1], [0], [0], [1], [0, 0, 1, 1], [], []>} : vector<2x128xf32>, vector<128x512xf32>, vector<2x512xf32> -> vector<2x512xf32>
      %42 = arith.addf %38, %41 : vector<2x512xf32>
      %c0_35 = arith.constant 0 : index
      %c0_36 = arith.constant 0 : index
      %43 = vector.load %arg4[%c0_35, %c0_36] : memref<1x512xf32, #tpu.memory_space<vmem>>, vector<1x512xf32>
      %44 = vector.broadcast %43 : vector<1x512xf32> to vector<2x512xf32>
      %45 = arith.addf %42, %44 : vector<2x512xf32>
      %46 = vector.extract_strided_slice %45 {offsets = [0, 0], sizes = [2, 128], strides = [1, 1]} : vector<2x512xf32> to vector<2x128xf32>
      %47 = arith.negf %46 : vector<2x128xf32>
      %48 = math.exp %47 : vector<2x128xf32>
      %cst_37 = arith.constant 1.000000e+00 : f32
      %49 = vector.broadcast %cst_37 : f32 to vector<2x128xf32>
      %50 = arith.addf %49, %48 : vector<2x128xf32>
      %51 = arith.divf %49, %50 : vector<2x128xf32>
      %52 = vector.extract_strided_slice %45 {offsets = [0, 128], sizes = [2, 128], strides = [1, 1]} : vector<2x512xf32> to vector<2x128xf32>
      %53 = arith.negf %52 : vector<2x128xf32>
      %54 = math.exp %53 : vector<2x128xf32>
      %cst_38 = arith.constant 1.000000e+00 : f32
      %55 = vector.broadcast %cst_38 : f32 to vector<2x128xf32>
      %56 = arith.addf %55, %54 : vector<2x128xf32>
      %57 = arith.divf %55, %56 : vector<2x128xf32>
      %58 = vector.extract_strided_slice %45 {offsets = [0, 256], sizes = [2, 128], strides = [1, 1]} : vector<2x512xf32> to vector<2x128xf32>
      %59 = math.tanh %58 : vector<2x128xf32>
      %60 = vector.extract_strided_slice %45 {offsets = [0, 384], sizes = [2, 128], strides = [1, 1]} : vector<2x512xf32> to vector<2x128xf32>
      %61 = arith.negf %60 : vector<2x128xf32>
      %62 = math.exp %61 : vector<2x128xf32>
      %cst_39 = arith.constant 1.000000e+00 : f32
      %63 = vector.broadcast %cst_39 : f32 to vector<2x128xf32>
      %64 = arith.addf %63, %62 : vector<2x128xf32>
      %65 = arith.divf %63, %64 : vector<2x128xf32>
      %c0_40 = arith.constant 0 : index
      %c0_41 = arith.constant 0 : index
      %66 = vector.load %arg9[%c0_40, %c0_41] : memref<2x128xf32, #tpu.memory_space<vmem>>, vector<2x128xf32>
      %67 = arith.mulf %57, %66 : vector<2x128xf32>
      %68 = arith.mulf %51, %59 : vector<2x128xf32>
      %69 = arith.addf %67, %68 : vector<2x128xf32>
      %c0_42 = arith.constant 0 : index
      %c0_43 = arith.constant 0 : index
      %70 = vector.load %arg9[%c0_42, %c0_43] : memref<2x128xf32, #tpu.memory_space<vmem>>, vector<2x128xf32>
      tpu.vector_store %arg9[%c0_42, %c0_43], %69 {strides = array<i32>} : memref<2x128xf32, #tpu.memory_space<vmem>>, vector<2x128xf32>,
      %71 = math.tanh %69 : vector<2x128xf32>
      %72 = arith.mulf %65, %71 : vector<2x128xf32>
      %c0_44 = arith.constant 0 : index
      %c0_45 = arith.constant 0 : index
      %73 = vector.load %arg8[%c0_44, %c0_45] : memref<2x128xf32, #tpu.memory_space<vmem>>, vector<2x128xf32>
      tpu.vector_store %arg8[%c0_44, %c0_45], %72 {strides = array<i32>} : memref<2x128xf32, #tpu.memory_space<vmem>>, vector<2x128xf32>,
    } else {
    }
    %c0 = arith.constant 0 : index
    %c0_3 = arith.constant 0 : index
    %8 = vector.load %arg8[%c0, %c0_3] : memref<2x128xf32, #tpu.memory_space<vmem>>, vector<2x128xf32>
    %9 = arith.truncf %8 : vector<2x128xf32> to vector<2x128xbf16>
    %c0_4 = arith.constant 0 : index
    %c0_5 = arith.constant 0 : index
    %10 = vector.load %arg7[%c0_4, %c0_5] : memref<8x128xbf16, #tpu.memory_space<vmem>>, vector<2x128xbf16>
    tpu.vector_store %arg7[%c0_4, %c0_5], %9 {strides = array<i32>} : memref<8x128xbf16, #tpu.memory_space<vmem>>, vector<2x128xbf16>,
    %c4_i32_6 = arith.constant 4 : i32
    %11 = arith.muli %arg0, %c4_i32_6 : i32
    %c1_i32_7 = arith.constant 1 : i32
    %12 = arith.addi %11, %c1_i32_7 : i32
    %c1_i32_8 = arith.constant 1 : i32
    %13 = arith.cmpi slt, %12, %c1_i32_8 : i32
    %14 = arith.extui %13 : i1 to i32
    %c0_i32_9 = arith.constant 0 : i32
    %15 = arith.cmpi ne, %14, %c0_i32_9 : i32
    scf.if %15 {
      %c1 = arith.constant 1 : index
      %c0_25 = arith.constant 0 : index
      %c0_26 = arith.constant 0 : index
      %35 = vector.load %arg1[%c1, %c0_25, %c0_26] : memref<4x2x128xf32, #tpu.memory_space<vmem>>, vector<1x2x128xf32>
      %36 = vector.shape_cast %35 : vector<1x2x128xf32> to vector<2x128xf32>
      %c0_27 = arith.constant 0 : index
      %c0_28 = arith.constant 0 : index
      %37 = vector.load %arg2[%c0_27, %c0_28] : memref<128x512xf32, #tpu.memory_space<vmem>>, vector<128x512xf32>
      %cst = arith.constant dense<0.000000e+00> : vector<2x512xf32>
      %38 = tpu.matmul %36, %37, %cst {dimension_numbers = #tpu.dot_dimension_numbers<[1], [0], [0], [1], [0, 0, 1, 1], [], []>} : vector<2x128xf32>, vector<128x512xf32>, vector<2x512xf32> -> vector<2x512xf32>
      %c0_29 = arith.constant 0 : index
      %c0_30 = arith.constant 0 : index
      %39 = vector.load %arg8[%c0_29, %c0_30] : memref<2x128xf32, #tpu.memory_space<vmem>>, vector<2x128xf32>
      %c0_31 = arith.constant 0 : index
      %c0_32 = arith.constant 0 : index
      %40 = vector.load %arg3[%c0_31, %c0_32] : memref<128x512xf32, #tpu.memory_space<vmem>>, vector<128x512xf32>
      %cst_33 = arith.constant dense<0.000000e+00> : vector<2x512xf32>
      %41 = tpu.matmul %39, %40, %cst_33 {dimension_numbers = #tpu.dot_dimension_numbers<[1], [0], [0], [1], [0, 0, 1, 1], [], []>} : vector<2x128xf32>, vector<128x512xf32>, vector<2x512xf32> -> vector<2x512xf32>
      %42 = arith.addf %38, %41 : vector<2x512xf32>
      %c0_34 = arith.constant 0 : index
      %c0_35 = arith.constant 0 : index
      %43 = vector.load %arg4[%c0_34, %c0_35] : memref<1x512xf32, #tpu.memory_space<vmem>>, vector<1x512xf32>
      %44 = vector.broadcast %43 : vector<1x512xf32> to vector<2x512xf32>
      %45 = arith.addf %42, %44 : vector<2x512xf32>
      %46 = vector.extract_strided_slice %45 {offsets = [0, 0], sizes = [2, 128], strides = [1, 1]} : vector<2x512xf32> to vector<2x128xf32>
      %47 = arith.negf %46 : vector<2x128xf32>
      %48 = math.exp %47 : vector<2x128xf32>
      %cst_36 = arith.constant 1.000000e+00 : f32
      %49 = vector.broadcast %cst_36 : f32 to vector<2x128xf32>
      %50 = arith.addf %49, %48 : vector<2x128xf32>
      %51 = arith.divf %49, %50 : vector<2x128xf32>
      %52 = vector.extract_strided_slice %45 {offsets = [0, 128], sizes = [2, 128], strides = [1, 1]} : vector<2x512xf32> to vector<2x128xf32>
      %53 = arith.negf %52 : vector<2x128xf32>
      %54 = math.exp %53 : vector<2x128xf32>
      %cst_37 = arith.constant 1.000000e+00 : f32
      %55 = vector.broadcast %cst_37 : f32 to vector<2x128xf32>
      %56 = arith.addf %55, %54 : vector<2x128xf32>
      %57 = arith.divf %55, %56 : vector<2x128xf32>
      %58 = vector.extract_strided_slice %45 {offsets = [0, 256], sizes = [2, 128], strides = [1, 1]} : vector<2x512xf32> to vector<2x128xf32>
      %59 = math.tanh %58 : vector<2x128xf32>
      %60 = vector.extract_strided_slice %45 {offsets = [0, 384], sizes = [2, 128], strides = [1, 1]} : vector<2x512xf32> to vector<2x128xf32>
      %61 = arith.negf %60 : vector<2x128xf32>
      %62 = math.exp %61 : vector<2x128xf32>
      %cst_38 = arith.constant 1.000000e+00 : f32
      %63 = vector.broadcast %cst_38 : f32 to vector<2x128xf32>
      %64 = arith.addf %63, %62 : vector<2x128xf32>
      %65 = arith.divf %63, %64 : vector<2x128xf32>
      %c0_39 = arith.constant 0 : index
      %c0_40 = arith.constant 0 : index
      %66 = vector.load %arg9[%c0_39, %c0_40] : memref<2x128xf32, #tpu.memory_space<vmem>>, vector<2x128xf32>
      %67 = arith.mulf %57, %66 : vector<2x128xf32>
      %68 = arith.mulf %51, %59 : vector<2x128xf32>
      %69 = arith.addf %67, %68 : vector<2x128xf32>
      %c0_41 = arith.constant 0 : index
      %c0_42 = arith.constant 0 : index
      %70 = vector.load %arg9[%c0_41, %c0_42] : memref<2x128xf32, #tpu.memory_space<vmem>>, vector<2x128xf32>
      tpu.vector_store %arg9[%c0_41, %c0_42], %69 {strides = array<i32>} : memref<2x128xf32, #tpu.memory_space<vmem>>, vector<2x128xf32>,
      %71 = math.tanh %69 : vector<2x128xf32>
      %72 = arith.mulf %65, %71 : vector<2x128xf32>
      %c0_43 = arith.constant 0 : index
      %c0_44 = arith.constant 0 : index
      %73 = vector.load %arg8[%c0_43, %c0_44] : memref<2x128xf32, #tpu.memory_space<vmem>>, vector<2x128xf32>
      tpu.vector_store %arg8[%c0_43, %c0_44], %72 {strides = array<i32>} : memref<2x128xf32, #tpu.memory_space<vmem>>, vector<2x128xf32>,
    } else {
    }
    %c0_10 = arith.constant 0 : index
    %c0_11 = arith.constant 0 : index
    %16 = vector.load %arg8[%c0_10, %c0_11] : memref<2x128xf32, #tpu.memory_space<vmem>>, vector<2x128xf32>
    %17 = arith.truncf %16 : vector<2x128xf32> to vector<2x128xbf16>
    %c2 = arith.constant 2 : index
    %c0_12 = arith.constant 0 : index
    %18 = vector.load %arg7[%c2, %c0_12] : memref<8x128xbf16, #tpu.memory_space<vmem>>, vector<2x128xbf16>
    tpu.vector_store %arg7[%c2, %c0_12], %17 {strides = array<i32>} : memref<8x128xbf16, #tpu.memory_space<vmem>>, vector<2x128xbf16>,
    %c4_i32_13 = arith.constant 4 : i32
    %19 = arith.muli %arg0, %c4_i32_13 : i32
    %c2_i32 = arith.constant 2 : i32
    %20 = arith.addi %19, %c2_i32 : i32
    %c1_i32_14 = arith.constant 1 : i32
    %21 = arith.cmpi slt, %20, %c1_i32_14 : i32
    %22 = arith.extui %21 : i1 to i32
    %c0_i32_15 = arith.constant 0 : i32
    %23 = arith.cmpi ne, %22, %c0_i32_15 : i32
    scf.if %23 {
      %c2_25 = arith.constant 2 : index
      %c0_26 = arith.constant 0 : index
      %c0_27 = arith.constant 0 : index
      %35 = vector.load %arg1[%c2_25, %c0_26, %c0_27] : memref<4x2x128xf32, #tpu.memory_space<vmem>>, vector<1x2x128xf32>
      %36 = vector.shape_cast %35 : vector<1x2x128xf32> to vector<2x128xf32>
      %c0_28 = arith.constant 0 : index
      %c0_29 = arith.constant 0 : index
      %37 = vector.load %arg2[%c0_28, %c0_29] : memref<128x512xf32, #tpu.memory_space<vmem>>, vector<128x512xf32>
      %cst = arith.constant dense<0.000000e+00> : vector<2x512xf32>
      %38 = tpu.matmul %36, %37, %cst {dimension_numbers = #tpu.dot_dimension_numbers<[1], [0], [0], [1], [0, 0, 1, 1], [], []>} : vector<2x128xf32>, vector<128x512xf32>, vector<2x512xf32> -> vector<2x512xf32>
      %c0_30 = arith.constant 0 : index
      %c0_31 = arith.constant 0 : index
      %39 = vector.load %arg8[%c0_30, %c0_31] : memref<2x128xf32, #tpu.memory_space<vmem>>, vector<2x128xf32>
      %c0_32 = arith.constant 0 : index
      %c0_33 = arith.constant 0 : index
      %40 = vector.load %arg3[%c0_32, %c0_33] : memref<128x512xf32, #tpu.memory_space<vmem>>, vector<128x512xf32>
      %cst_34 = arith.constant dense<0.000000e+00> : vector<2x512xf32>
      %41 = tpu.matmul %39, %40, %cst_34 {dimension_numbers = #tpu.dot_dimension_numbers<[1], [0], [0], [1], [0, 0, 1, 1], [], []>} : vector<2x128xf32>, vector<128x512xf32>, vector<2x512xf32> -> vector<2x512xf32>
      %42 = arith.addf %38, %41 : vector<2x512xf32>
      %c0_35 = arith.constant 0 : index
      %c0_36 = arith.constant 0 : index
      %43 = vector.load %arg4[%c0_35, %c0_36] : memref<1x512xf32, #tpu.memory_space<vmem>>, vector<1x512xf32>
      %44 = vector.broadcast %43 : vector<1x512xf32> to vector<2x512xf32>
      %45 = arith.addf %42, %44 : vector<2x512xf32>
      %46 = vector.extract_strided_slice %45 {offsets = [0, 0], sizes = [2, 128], strides = [1, 1]} : vector<2x512xf32> to vector<2x128xf32>
      %47 = arith.negf %46 : vector<2x128xf32>
      %48 = math.exp %47 : vector<2x128xf32>
      %cst_37 = arith.constant 1.000000e+00 : f32
      %49 = vector.broadcast %cst_37 : f32 to vector<2x128xf32>
      %50 = arith.addf %49, %48 : vector<2x128xf32>
      %51 = arith.divf %49, %50 : vector<2x128xf32>
      %52 = vector.extract_strided_slice %45 {offsets = [0, 128], sizes = [2, 128], strides = [1, 1]} : vector<2x512xf32> to vector<2x128xf32>
      %53 = arith.negf %52 : vector<2x128xf32>
      %54 = math.exp %53 : vector<2x128xf32>
      %cst_38 = arith.constant 1.000000e+00 : f32
      %55 = vector.broadcast %cst_38 : f32 to vector<2x128xf32>
      %56 = arith.addf %55, %54 : vector<2x128xf32>
      %57 = arith.divf %55, %56 : vector<2x128xf32>
      %58 = vector.extract_strided_slice %45 {offsets = [0, 256], sizes = [2, 128], strides = [1, 1]} : vector<2x512xf32> to vector<2x128xf32>
      %59 = math.tanh %58 : vector<2x128xf32>
      %60 = vector.extract_strided_slice %45 {offsets = [0, 384], sizes = [2, 128], strides = [1, 1]} : vector<2x512xf32> to vector<2x128xf32>
      %61 = arith.negf %60 : vector<2x128xf32>
      %62 = math.exp %61 : vector<2x128xf32>
      %cst_39 = arith.constant 1.000000e+00 : f32
      %63 = vector.broadcast %cst_39 : f32 to vector<2x128xf32>
      %64 = arith.addf %63, %62 : vector<2x128xf32>
      %65 = arith.divf %63, %64 : vector<2x128xf32>
      %c0_40 = arith.constant 0 : index
      %c0_41 = arith.constant 0 : index
      %66 = vector.load %arg9[%c0_40, %c0_41] : memref<2x128xf32, #tpu.memory_space<vmem>>, vector<2x128xf32>
      %67 = arith.mulf %57, %66 : vector<2x128xf32>
      %68 = arith.mulf %51, %59 : vector<2x128xf32>
      %69 = arith.addf %67, %68 : vector<2x128xf32>
      %c0_42 = arith.constant 0 : index
      %c0_43 = arith.constant 0 : index
      %70 = vector.load %arg9[%c0_42, %c0_43] : memref<2x128xf32, #tpu.memory_space<vmem>>, vector<2x128xf32>
      tpu.vector_store %arg9[%c0_42, %c0_43], %69 {strides = array<i32>} : memref<2x128xf32, #tpu.memory_space<vmem>>, vector<2x128xf32>,
      %71 = math.tanh %69 : vector<2x128xf32>
      %72 = arith.mulf %65, %71 : vector<2x128xf32>
      %c0_44 = arith.constant 0 : index
      %c0_45 = arith.constant 0 : index
      %73 = vector.load %arg8[%c0_44, %c0_45] : memref<2x128xf32, #tpu.memory_space<vmem>>, vector<2x128xf32>
      tpu.vector_store %arg8[%c0_44, %c0_45], %72 {strides = array<i32>} : memref<2x128xf32, #tpu.memory_space<vmem>>, vector<2x128xf32>,
    } else {
    }
    %c0_16 = arith.constant 0 : index
    %c0_17 = arith.constant 0 : index
    %24 = vector.load %arg8[%c0_16, %c0_17] : memref<2x128xf32, #tpu.memory_space<vmem>>, vector<2x128xf32>
    %25 = arith.truncf %24 : vector<2x128xf32> to vector<2x128xbf16>
    %c4 = arith.constant 4 : index
    %c0_18 = arith.constant 0 : index
    %26 = vector.load %arg7[%c4, %c0_18] : memref<8x128xbf16, #tpu.memory_space<vmem>>, vector<2x128xbf16>
    tpu.vector_store %arg7[%c4, %c0_18], %25 {strides = array<i32>} : memref<8x128xbf16, #tpu.memory_space<vmem>>, vector<2x128xbf16>,
    %c4_i32_19 = arith.constant 4 : i32
    %27 = arith.muli %arg0, %c4_i32_19 : i32
    %c3_i32 = arith.constant 3 : i32
    %28 = arith.addi %27, %c3_i32 : i32
    %c1_i32_20 = arith.constant 1 : i32
    %29 = arith.cmpi slt, %28, %c1_i32_20 : i32
    %30 = arith.extui %29 : i1 to i32
    %c0_i32_21 = arith.constant 0 : i32
    %31 = arith.cmpi ne, %30, %c0_i32_21 : i32
    scf.if %31 {
      %c3 = arith.constant 3 : index
      %c0_25 = arith.constant 0 : index
      %c0_26 = arith.constant 0 : index
      %35 = vector.load %arg1[%c3, %c0_25, %c0_26] : memref<4x2x128xf32, #tpu.memory_space<vmem>>, vector<1x2x128xf32>
      %36 = vector.shape_cast %35 : vector<1x2x128xf32> to vector<2x128xf32>
      %c0_27 = arith.constant 0 : index
      %c0_28 = arith.constant 0 : index
      %37 = vector.load %arg2[%c0_27, %c0_28] : memref<128x512xf32, #tpu.memory_space<vmem>>, vector<128x512xf32>
      %cst = arith.constant dense<0.000000e+00> : vector<2x512xf32>
      %38 = tpu.matmul %36, %37, %cst {dimension_numbers = #tpu.dot_dimension_numbers<[1], [0], [0], [1], [0, 0, 1, 1], [], []>} : vector<2x128xf32>, vector<128x512xf32>, vector<2x512xf32> -> vector<2x512xf32>
      %c0_29 = arith.constant 0 : index
      %c0_30 = arith.constant 0 : index
      %39 = vector.load %arg8[%c0_29, %c0_30] : memref<2x128xf32, #tpu.memory_space<vmem>>, vector<2x128xf32>
      %c0_31 = arith.constant 0 : index
      %c0_32 = arith.constant 0 : index
      %40 = vector.load %arg3[%c0_31, %c0_32] : memref<128x512xf32, #tpu.memory_space<vmem>>, vector<128x512xf32>
      %cst_33 = arith.constant dense<0.000000e+00> : vector<2x512xf32>
      %41 = tpu.matmul %39, %40, %cst_33 {dimension_numbers = #tpu.dot_dimension_numbers<[1], [0], [0], [1], [0, 0, 1, 1], [], []>} : vector<2x128xf32>, vector<128x512xf32>, vector<2x512xf32> -> vector<2x512xf32>
      %42 = arith.addf %38, %41 : vector<2x512xf32>
      %c0_34 = arith.constant 0 : index
      %c0_35 = arith.constant 0 : index
      %43 = vector.load %arg4[%c0_34, %c0_35] : memref<1x512xf32, #tpu.memory_space<vmem>>, vector<1x512xf32>
      %44 = vector.broadcast %43 : vector<1x512xf32> to vector<2x512xf32>
      %45 = arith.addf %42, %44 : vector<2x512xf32>
      %46 = vector.extract_strided_slice %45 {offsets = [0, 0], sizes = [2, 128], strides = [1, 1]} : vector<2x512xf32> to vector<2x128xf32>
      %47 = arith.negf %46 : vector<2x128xf32>
      %48 = math.exp %47 : vector<2x128xf32>
      %cst_36 = arith.constant 1.000000e+00 : f32
      %49 = vector.broadcast %cst_36 : f32 to vector<2x128xf32>
      %50 = arith.addf %49, %48 : vector<2x128xf32>
      %51 = arith.divf %49, %50 : vector<2x128xf32>
      %52 = vector.extract_strided_slice %45 {offsets = [0, 128], sizes = [2, 128], strides = [1, 1]} : vector<2x512xf32> to vector<2x128xf32>
      %53 = arith.negf %52 : vector<2x128xf32>
      %54 = math.exp %53 : vector<2x128xf32>
      %cst_37 = arith.constant 1.000000e+00 : f32
      %55 = vector.broadcast %cst_37 : f32 to vector<2x128xf32>
      %56 = arith.addf %55, %54 : vector<2x128xf32>
      %57 = arith.divf %55, %56 : vector<2x128xf32>
      %58 = vector.extract_strided_slice %45 {offsets = [0, 256], sizes = [2, 128], strides = [1, 1]} : vector<2x512xf32> to vector<2x128xf32>
      %59 = math.tanh %58 : vector<2x128xf32>
      %60 = vector.extract_strided_slice %45 {offsets = [0, 384], sizes = [2, 128], strides = [1, 1]} : vector<2x512xf32> to vector<2x128xf32>
      %61 = arith.negf %60 : vector<2x128xf32>
      %62 = math.exp %61 : vector<2x128xf32>
      %cst_38 = arith.constant 1.000000e+00 : f32
      %63 = vector.broadcast %cst_38 : f32 to vector<2x128xf32>
      %64 = arith.addf %63, %62 : vector<2x128xf32>
      %65 = arith.divf %63, %64 : vector<2x128xf32>
      %c0_39 = arith.constant 0 : index
      %c0_40 = arith.constant 0 : index
      %66 = vector.load %arg9[%c0_39, %c0_40] : memref<2x128xf32, #tpu.memory_space<vmem>>, vector<2x128xf32>
      %67 = arith.mulf %57, %66 : vector<2x128xf32>
      %68 = arith.mulf %51, %59 : vector<2x128xf32>
      %69 = arith.addf %67, %68 : vector<2x128xf32>
      %c0_41 = arith.constant 0 : index
      %c0_42 = arith.constant 0 : index
      %70 = vector.load %arg9[%c0_41, %c0_42] : memref<2x128xf32, #tpu.memory_space<vmem>>, vector<2x128xf32>
      tpu.vector_store %arg9[%c0_41, %c0_42], %69 {strides = array<i32>} : memref<2x128xf32, #tpu.memory_space<vmem>>, vector<2x128xf32>,
      %71 = math.tanh %69 : vector<2x128xf32>
      %72 = arith.mulf %65, %71 : vector<2x128xf32>
      %c0_43 = arith.constant 0 : index
      %c0_44 = arith.constant 0 : index
      %73 = vector.load %arg8[%c0_43, %c0_44] : memref<2x128xf32, #tpu.memory_space<vmem>>, vector<2x128xf32>
      tpu.vector_store %arg8[%c0_43, %c0_44], %72 {strides = array<i32>} : memref<2x128xf32, #tpu.memory_space<vmem>>, vector<2x128xf32>,
    } else {
    }
    %c0_22 = arith.constant 0 : index
    %c0_23 = arith.constant 0 : index
    %32 = vector.load %arg8[%c0_22, %c0_23] : memref<2x128xf32, #tpu.memory_space<vmem>>, vector<2x128xf32>
    %33 = arith.truncf %32 : vector<2x128xf32> to vector<2x128xbf16>
    %c6 = arith.constant 6 : index
    %c0_24 = arith.constant 0 : index
    %34 = vector.load %arg7[%c6, %c0_24] : memref<8x128xbf16, #tpu.memory_space<vmem>>, vector<2x128xbf16>
    tpu.vector_store %arg7[%c6, %c0_24], %33 {strides = array<i32>} : memref<8x128xbf16, #tpu.memory_space<vmem>>, vector<2x128xbf16>,
    return
  }
  func.func @transform_0(%arg0: i32) -> (i32, i32, i32) {
    %c0_i32 = arith.constant 0 : i32
    %c0_i32_0 = arith.constant 0 : i32
    %c0_i32_1 = arith.constant 0 : i32
    return %arg0, %c0_i32, %c0_i32_0 : i32, i32, i32
  }
  func.func @transform_1(%arg0: i32) -> (i32, i32) {
    %c0_i32 = arith.constant 0 : i32
    %c0_i32_0 = arith.constant 0 : i32
    %c0_i32_1 = arith.constant 0 : i32
    return %c0_i32, %c0_i32_0 : i32, i32
  }
  func.func @transform_2(%arg0: i32) -> (i32, i32) {
    %c0_i32 = arith.constant 0 : i32
    %c0_i32_0 = arith.constant 0 : i32
    %c0_i32_1 = arith.constant 0 : i32
    return %c0_i32, %c0_i32_0 : i32, i32
  }
  func.func @transform_3(%arg0: i32) -> (i32, i32) {
    %c0_i32 = arith.constant 0 : i32
    %c0_i32_0 = arith.constant 0 : i32
    %c0_i32_1 = arith.constant 0 : i32
    return %c0_i32, %c0_i32_0 : i32, i32
  }
  func.func @transform_4(%arg0: i32) -> (i32, i32) {
    %c0_i32 = arith.constant 0 : i32
    %c0_i32_0 = arith.constant 0 : i32
    %c0_i32_1 = arith.constant 0 : i32
    return %c0_i32, %c0_i32_0 : i32, i32
  }
  func.func @transform_5(%arg0: i32) -> (i32, i32) {
    %c0_i32 = arith.constant 0 : i32
    %c0_i32_0 = arith.constant 0 : i32
    %c0_i32_1 = arith.constant 0 : i32
    return %c0_i32, %c0_i32_0 : i32, i32
  }
  func.func @transform_6(%arg0: i32) -> (i32, i32) {
    %c0_i32 = arith.constant 0 : i32
    %c0_i32_0 = arith.constant 0 : i32
    return %arg0, %c0_i32 : i32, i32
  }
  func.func @transform_7(%arg0: i32) -> (i32, i32) {
    %c0_i32 = arith.constant 0 : i32
    %c0_i32_0 = arith.constant 0 : i32
    %c0_i32_1 = arith.constant 0 : i32
    return %c0_i32, %c0_i32_0 : i32, i32
  }
  func.func @transform_8(%arg0: i32) -> (i32, i32) {
    %c0_i32 = arith.constant 0 : i32
    %c0_i32_0 = arith.constant 0 : i32
    %c0_i32_1 = arith.constant 0 : i32
    return %c0_i32, %c0_i32_0 : i32, i32
  }
}

</mosaic_0001>

<llo_original>
// kernel: tpu_custom_call.1
$region0: #{tpu_custom_call.1}
  #allocation0 [shape = 'u32[]', space=smem, size = 0x4, offset = 0x4, fixed_abs, tag = 'smem constant byte address 0x4 - core index']
  #allocation1 [shape = 'u32[144,128]{1,0:T(1,128)}', space=vmem, size = 0x12000, scoped, tag = 'internal scratch']
  %s0 = inlined_call_operand.hbm [shape: f32[4,2,128], index: 0, kind: input, shape index: {}]
  %s1 = inlined_call_operand.hbm [shape: f32[128,512], index: 1, kind: input, shape index: {}]
  %s2 = inlined_call_operand.hbm [shape: f32[128,512], index: 2, kind: input, shape index: {}]
  %s3 = inlined_call_operand.vmem [shape: f32[1,512], index: 3, kind: input, shape index: {}]
  %s4 = inlined_call_operand.vmem [shape: f32[2,128], index: 4, kind: input, shape index: {}]
  %s5 = inlined_call_operand.vmem [shape: f32[2,128], index: 5, kind: input, shape index: {}]
  %s6 = inlined_call_operand.hbm [shape: bf16[8,128], index: 6, kind: output, shape index: {0}]
  %s7 = inlined_call_operand.hbm [shape: f32[2,128], index: 7, kind: output, shape index: {1}]
  %s8 = inlined_call_operand.hbm [shape: f32[2,128], index: 8, kind: output, shape index: {2}]
  %9 = xla_tuple %s6, %s7, %s8
  %s10 = sld [smem:[#allocation0]]
  $region82: #{tpu_custom_call.1} parent=0
    _
  %s12 = ssub.s32 1, %s10
  %s13 = scalar_select 0, %s12, %s10
  $region1: #{tpu_custom_call.1} parent=0
    #allocation2 [shape = 'u8[4096]{0}', space=vmem, size = 0x1000, scoped, tag = 'input window, operand 0, single buffered']
    #allocation3 [shape = 's32[1]{0}', space=sflag, size = 0x4, scoped, tag = 'scoped memory for tpu_custom_call.1']
    #allocation4 [shape = 's32[1]{0}', space=sflag, size = 0x4, scoped, tag = 'scoped memory for tpu_custom_call.1']
    #allocation5 [shape = 'u8[262144]{0}', space=vmem, size = 0x40000, scoped, tag = 'input window, operand 1, single buffered']
    #allocation6 [shape = 's32[1]{0}', space=sflag, size = 0x4, scoped, tag = 'scoped memory for tpu_custom_call.1']
    #allocation7 [shape = 'u8[262144]{0}', space=vmem, size = 0x40000, scoped, tag = 'input window, operand 2, single buffered']
    #allocation8 [shape = 'u8[2048]{0}', space=vmem, size = 0x800, scoped, tag = 'output window, operand 0, single buffered']
    #allocation9 [shape = 'u8[1024]{0}', space=vmem, size = 0x400, scoped, tag = 'output window, operand 1, single buffered']
    #allocation10 [shape = 's32[1]{0}', space=sflag, size = 0x4, scoped, tag = 'scoped memory for tpu_custom_call.1']
    #allocation11 [shape = 'u8[1024]{0}', space=vmem, size = 0x400, scoped, tag = 'output window, operand 2, single buffered']
    %14 = vsyncpa [#allocation3], 0
    %15 = vsyncpa [#allocation6], 0
    %16 = vsyncpa [#allocation4], 0
    %17 = vsyncpa [#allocation10], 0
    // Predicated region
    $region2: #{tpu_custom_call.1} parent=1 // pred_check
      _
    $region3: #{tpu_custom_call.1} parent=1 // pred_check_branch
      %19 = sbr.rel (0) target = $region5
    $region4: #{tpu_custom_call.1} parent=1 // pred_region
      %s21 = ssub.s32 128, 128
      %22 = vsyncadd [#allocation3], %s21
      %s23 = sshll.u32 [#allocation2], 4
      %s24 = int_to_ptr.vmem [resolvable:$true] %s23
      %29 = dma.hbm_to_vmem [thread:$0]  %s0, 128, %s24, [#allocation3], 32, 32, 2
    $region5: #{tpu_custom_call.1} parent=1 // pred_fallthru
      _
    // Predicated region
    $region6: #{tpu_custom_call.1} parent=1 // pred_check
      _
    $region7: #{tpu_custom_call.1} parent=1 // pred_check_branch
      %31 = sbr.rel (0) target = $region9
    $region8: #{tpu_custom_call.1} parent=1 // pred_region
      %s33 = ssub.s32 8192, 8192
      %34 = vsyncadd [#allocation6], %s33
      %s35 = sshll.u32 [#allocation5], 4
      %s36 = int_to_ptr.vmem [resolvable:$true] %s35
      %41 = dma.hbm_to_vmem [thread:$0]  %s1, 8192, %s36, [#allocation6], 512, 512, 32
    $region9: #{tpu_custom_call.1} parent=1 // pred_fallthru
      _
    // Predicated region
    $region10: #{tpu_custom_call.1} parent=1 // pred_check
      _
    $region11: #{tpu_custom_call.1} parent=1 // pred_check_branch
      %43 = sbr.rel (0) target = $region13
    $region12: #{tpu_custom_call.1} parent=1 // pred_region
      %s45 = ssub.s32 8192, 8192
      %46 = vsyncadd [#allocation6], %s45
      %s47 = sshll.u32 [#allocation7], 4
      %s48 = int_to_ptr.vmem [resolvable:$true] %s47
      %53 = dma.hbm_to_vmem [thread:$0]  %s2, 8192, %s48, [#allocation6], 512, 512, 32
    $region13: #{tpu_custom_call.1} parent=1 // pred_fallthru
      _
    // Predicated region
    $region14: #{tpu_custom_call.1} parent=1 // pred_check
      _
    $region15: #{tpu_custom_call.1} parent=1 // pred_check_branch
      %55 = sbr.rel (0) target = $region17
    $region16: #{tpu_custom_call.1} parent=1 // pred_region
      _
    $region17: #{tpu_custom_call.1} parent=1 // pred_fallthru
      _
    // Predicated region
    $region18: #{tpu_custom_call.1} parent=1 // pred_check
      _
    $region19: #{tpu_custom_call.1} parent=1 // pred_check_branch
      %57 = sbr.rel (0) target = $region21
    $region20: #{tpu_custom_call.1} parent=1 // pred_region
      _
    $region21: #{tpu_custom_call.1} parent=1 // pred_fallthru
      _
    // Predicated region
    $region22: #{tpu_custom_call.1} parent=1 // pred_check
      _
    $region23: #{tpu_custom_call.1} parent=1 // pred_check_branch
      %59 = sbr.rel (0) target = $region25
    $region24: #{tpu_custom_call.1} parent=1 // pred_region
      _
    $region25: #{tpu_custom_call.1} parent=1 // pred_fallthru
      _
    // Predicated region
    $region26: #{tpu_custom_call.1} parent=1 // pred_check
      _
    $region27: #{tpu_custom_call.1} parent=1 // pred_check_branch
      %61 = sbr.rel (0) target = $region29
    $region28: #{tpu_custom_call.1} parent=1 // pred_region
      %62 = dma.done [#allocation3], 128
    $region29: #{tpu_custom_call.1} parent=1 // pred_fallthru
      _
    // Predicated region
    $region30: #{tpu_custom_call.1} parent=1 // pred_check
      _
    $region31: #{tpu_custom_call.1} parent=1 // pred_check_branch
      %64 = sbr.rel (0) target = $region33
    $region32: #{tpu_custom_call.1} parent=1 // pred_region
      %65 = dma.done [#allocation6], 8192
    $region33: #{tpu_custom_call.1} parent=1 // pred_fallthru
      _
    // Predicated region
    $region34: #{tpu_custom_call.1} parent=1 // pred_check
      _
    $region35: #{tpu_custom_call.1} parent=1 // pred_check_branch
      %67 = sbr.rel (0) target = $region37
    $region36: #{tpu_custom_call.1} parent=1 // pred_region
      %68 = dma.done [#allocation6], 8192
    $region37: #{tpu_custom_call.1} parent=1 // pred_fallthru
      _
    %p69 = scmp.eq.s32.totalorder 0, 0
    // Predicated region
    $region38: #{tpu_custom_call.1} parent=1 // pred_check
      %p70 = pneg %p69
    $region39: #{tpu_custom_call.1} parent=1 // pred_check_branch
      %72 = sbr.rel (%p70) target = $region41
    $region40: #{tpu_custom_call.1} parent=1 // pred_region
      %v73 = vld [vmem:[%s4] sm:$0x3]
      %74 = vst [vmem:[#allocation9] sm:$0x3] %v73
      %v75 = vld [vmem:[%s5] sm:$0x3]
      %76 = vst [vmem:[#allocation11] sm:$0x3] %v75
    $region41: #{tpu_custom_call.1} parent=1 // pred_fallthru
      _
    %s77 = smul.u32 0, 4
    %p78 = scmp.lt.s32.totalorder %s77, 1
    // Predicated region
    $region42: #{tpu_custom_call.1} parent=1 // pred_check
      %p79 = pneg %p78
    $region43: #{tpu_custom_call.1} parent=1 // pred_check_branch
      %81 = sbr.rel (%p79) target = $region45
    $region44: #{tpu_custom_call.1} parent=1 // pred_region
      %v82 = vld [vmem:[#allocation2] sm:$0x3]
      %v83 = vld [vmem:[#allocation5] sm:$0xff]
      %v84 = vld [vmem:[#allocation5 + $0x8] sm:$0xff]
      %v85 = vld [vmem:[#allocation5 + $0x10] sm:$0xff]
      %v86 = vld [vmem:[#allocation5 + $0x18] sm:$0xff]
      %v87 = vld [vmem:[#allocation5 + $0x20] sm:$0xff]
      %v88 = vld [vmem:[#allocation5 + $0x28] sm:$0xff]
      %v89 = vld [vmem:[#allocation5 + $0x30] sm:$0xff]
      %v90 = vld [vmem:[#allocation5 + $0x38] sm:$0xff]
      %v91 = vld [vmem:[#allocation5 + $0x40] sm:$0xff]
      %v92 = vld [vmem:[#allocation5 + $0x48] sm:$0xff]
      %v93 = vld [vmem:[#allocation5 + $0x50] sm:$0xff]
      %v94 = vld [vmem:[#allocation5 + $0x58] sm:$0xff]
      %v95 = vld [vmem:[#allocation5 + $0x60] sm:$0xff]
      %v96 = vld [vmem:[#allocation5 + $0x68] sm:$0xff]
      %v97 = vld [vmem:[#allocation5 + $0x70] sm:$0xff]
      %v98 = vld [vmem:[#allocation5 + $0x78] sm:$0xff]
      %v99 = vld [vmem:[#allocation5 + $0x80] sm:$0xff]
      %v100 = vld [vmem:[#allocation5 + $0x88] sm:$0xff]
      %v101 = vld [vmem:[#allocation5 + $0x90] sm:$0xff]
      %v102 = vld [vmem:[#allocation5 + $0x98] sm:$0xff]
      %v103 = vld [vmem:[#allocation5 + $0xa0] sm:$0xff]
      %v104 = vld [vmem:[#allocation5 + $0xa8] sm:$0xff]
      %v105 = vld [vmem:[#allocation5 + $0xb0] sm:$0xff]
      %v106 = vld [vmem:[#allocation5 + $0xb8] sm:$0xff]
      %v107 = vld [vmem:[#allocation5 + $0xc0] sm:$0xff]
      %v108 = vld [vmem:[#allocation5 + $0xc8] sm:$0xff]
      %v109 = vld [vmem:[#allocation5 + $0xd0] sm:$0xff]
      %v110 = vld [vmem:[#allocation5 + $0xd8] sm:$0xff]
      %v111 = vld [vmem:[#allocation5 + $0xe0] sm:$0xff]
      %v112 = vld [vmem:[#allocation5 + $0xe8] sm:$0xff]
      %v113 = vld [vmem:[#allocation5 + $0xf0] sm:$0xff]
      %v114 = vld [vmem:[#allocation5 + $0xf8] sm:$0xff]
      %v115 = vld [vmem:[#allocation5 + $0x100] sm:$0xff]
      %v116 = vld [vmem:[#allocation5 + $0x108] sm:$0xff]
      %v117 = vld [vmem:[#allocation5 + $0x110] sm:$0xff]
      %v118 = vld [vmem:[#allocation5 + $0x118] sm:$0xff]
      %v119 = vld [vmem:[#allocation5 + $0x120] sm:$0xff]
      %v120 = vld [vmem:[#allocation5 + $0x128] sm:$0xff]
      %v121 = vld [vmem:[#allocation5 + $0x130] sm:$0xff]
      %v122 = vld [vmem:[#allocation5 + $0x138] sm:$0xff]
      %v123 = vld [vmem:[#allocation5 + $0x140] sm:$0xff]
      %v124 = vld [vmem:[#allocation5 + $0x148] sm:$0xff]
      %v125 = vld [vmem:[#allocation5 + $0x150] sm:$0xff]
      %v126 = vld [vmem:[#allocation5 + $0x158] sm:$0xff]
      %v127 = vld [vmem:[#allocation5 + $0x160] sm:$0xff]
      %v128 = vld [vmem:[#allocation5 + $0x168] sm:$0xff]
      %v129 = vld [vmem:[#allocation5 + $0x170] sm:$0xff]
      %v130 = vld [vmem:[#allocation5 + $0x178] sm:$0xff]
      %v131 = vld [vmem:[#allocation5 + $0x180] sm:$0xff]
      %v132 = vld [vmem:[#allocation5 + $0x188] sm:$0xff]
      %v133 = vld [vmem:[#allocation5 + $0x190] sm:$0xff]
      %v134 = vld [vmem:[#allocation5 + $0x198] sm:$0xff]
      %v135 = vld [vmem:[#allocation5 + $0x1a0] sm:$0xff]
      %v136 = vld [vmem:[#allocation5 + $0x1a8] sm:$0xff]
      %v137 = vld [vmem:[#allocation5 + $0x1b0] sm:$0xff]
      %v138 = vld [vmem:[#allocation5 + $0x1b8] sm:$0xff]
      %v139 = vld [vmem:[#allocation5 + $0x1c0] sm:$0xff]
      %v140 = vld [vmem:[#allocation5 + $0x1c8] sm:$0xff]
      %v141 = vld [vmem:[#allocation5 + $0x1d0] sm:$0xff]
      %v142 = vld [vmem:[#allocation5 + $0x1d8] sm:$0xff]
      %v143 = vld [vmem:[#allocation5 + $0x1e0] sm:$0xff]
      %v144 = vld [vmem:[#allocation5 + $0x1e8] sm:$0xff]
      %v145 = vld [vmem:[#allocation5 + $0x1f0] sm:$0xff]
      %v146 = vld [vmem:[#allocation5 + $0x1f8] sm:$0xff]
      %v147 = vld [vmem:[#allocation9] sm:$0x3]
      %v148 = vld [vmem:[#allocation7] sm:$0xff]
      %v149 = vld [vmem:[#allocation7 + $0x8] sm:$0xff]
      %v150 = vld [vmem:[#allocation7 + $0x10] sm:$0xff]
      %v151 = vld [vmem:[#allocation7 + $0x18] sm:$0xff]
      %v152 = vld [vmem:[#allocation7 + $0x20] sm:$0xff]
      %v153 = vld [vmem:[#allocation7 + $0x28] sm:$0xff]
      %v154 = vld [vmem:[#allocation7 + $0x30] sm:$0xff]
      %v155 = vld [vmem:[#allocation7 + $0x38] sm:$0xff]
      %v156 = vld [vmem:[#allocation7 + $0x40] sm:$0xff]
      %v157 = vld [vmem:[#allocation7 + $0x48] sm:$0xff]
      %v158 = vld [vmem:[#allocation7 + $0x50] sm:$0xff]
      %v159 = vld [vmem:[#allocation7 + $0x58] sm:$0xff]
      %v160 = vld [vmem:[#allocation7 + $0x60] sm:$0xff]
      %v161 = vld [vmem:[#allocation7 + $0x68] sm:$0xff]
      %v162 = vld [vmem:[#allocation7 + $0x70] sm:$0xff]
      %v163 = vld [vmem:[#allocation7 + $0x78] sm:$0xff]
      %v164 = vld [vmem:[#allocation7 + $0x80] sm:$0xff]
      %v165 = vld [vmem:[#allocation7 + $0x88] sm:$0xff]
      %v166 = vld [vmem:[#allocation7 + $0x90] sm:$0xff]
      %v167 = vld [vmem:[#allocation7 + $0x98] sm:$0xff]
      %v168 = vld [vmem:[#allocation7 + $0xa0] sm:$0xff]
      %v169 = vld [vmem:[#allocation7 + $0xa8] sm:$0xff]
      %v170 = vld [vmem:[#allocation7 + $0xb0] sm:$0xff]
      %v171 = vld [vmem:[#allocation7 + $0xb8] sm:$0xff]
      %v172 = vld [vmem:[#allocation7 + $0xc0] sm:$0xff]
      %v173 = vld [vmem:[#allocation7 + $0xc8] sm:$0xff]
      %v174 = vld [vmem:[#allocation7 + $0xd0] sm:$0xff]
      %v175 = vld [vmem:[#allocation7 + $0xd8] sm:$0xff]
      %v176 = vld [vmem:[#allocation7 + $0xe0] sm:$0xff]
      %v177 = vld [vmem:[#allocation7 + $0xe8] sm:$0xff]
      %v178 = vld [vmem:[#allocation7 + $0xf0] sm:$0xff]
      %v179 = vld [vmem:[#allocation7 + $0xf8] sm:$0xff]
      %v180 = vld [vmem:[#allocation7 + $0x100] sm:$0xff]
      %v181 = vld [vmem:[#allocation7 + $0x108] sm:$0xff]
      %v182 = vld [vmem:[#allocation7 + $0x110] sm:$0xff]
      %v183 = vld [vmem:[#allocation7 + $0x118] sm:$0xff]
      %v184 = vld [vmem:[#allocation7 + $0x120] sm:$0xff]
      %v185 = vld [vmem:[#allocation7 + $0x128] sm:$0xff]
      %v186 = vld [vmem:[#allocation7 + $0x130] sm:$0xff]
      %v187 = vld [vmem:[#allocation7 + $0x138] sm:$0xff]
      %v188 = vld [vmem:[#allocation7 + $0x140] sm:$0xff]
      %v189 = vld [vmem:[#allocation7 + $0x148] sm:$0xff]
      %v190 = vld [vmem:[#allocation7 + $0x150] sm:$0xff]
      %v191 = vld [vmem:[#allocation7 + $0x158] sm:$0xff]
      %v192 = vld [vmem:[#allocation7 + $0x160] sm:$0xff]
      %v193 = vld [vmem:[#allocation7 + $0x168] sm:$0xff]
      %v194 = vld [vmem:[#allocation7 + $0x170] sm:$0xff]
      %v195 = vld [vmem:[#allocation7 + $0x178] sm:$0xff]
      %v196 = vld [vmem:[#allocation7 + $0x180] sm:$0xff]
      %v197 = vld [vmem:[#allocation7 + $0x188] sm:$0xff]
      %v198 = vld [vmem:[#allocation7 + $0x190] sm:$0xff]
      %v199 = vld [vmem:[#allocation7 + $0x198] sm:$0xff]
      %v200 = vld [vmem:[#allocation7 + $0x1a0] sm:$0xff]
      %v201 = vld [vmem:[#allocation7 + $0x1a8] sm:$0xff]
      %v202 = vld [vmem:[#allocation7 + $0x1b0] sm:$0xff]
      %v203 = vld [vmem:[#allocation7 + $0x1b8] sm:$0xff]
      %v204 = vld [vmem:[#allocation7 + $0x1c0] sm:$0xff]
      %v205 = vld [vmem:[#allocation7 + $0x1c8] sm:$0xff]
      %v206 = vld [vmem:[#allocation7 + $0x1d0] sm:$0xff]
      %v207 = vld [vmem:[#allocation7 + $0x1d8] sm:$0xff]
      %v208 = vld [vmem:[#allocation7 + $0x1e0] sm:$0xff]
      %v209 = vld [vmem:[#allocation7 + $0x1e8] sm:$0xff]
      %v210 = vld [vmem:[#allocation7 + $0x1f0] sm:$0xff]
      %v211 = vld [vmem:[#allocation7 + $0x1f8] sm:$0xff]
      %212 = vmatprep.subr.mxu0 %v149
      %213 = vmatpush1.msra.mxu0 %v148
      %214 = vmatprep.subr.mxu0 %v153
      %215 = vmatpush1.msra.mxu0 %v152
      %216 = vmatprep.subr.mxu0 %v157
      %217 = vmatpush1.msra.mxu0 %v156
      %218 = vmatprep.subr.mxu0 %v161
      %219 = vmatpush1.msra.mxu0 %v160
      %220 = vmatprep.subr.mxu0 %v165
      %221 = vmatpush1.msra.mxu0 %v164
      %222 = vmatprep.subr.mxu0 %v169
      %223 = vmatpush1.msra.mxu0 %v168
      %224 = vmatprep.subr.mxu0 %v173
      %225 = vmatpush1.msra.mxu0 %v172
      %226 = vmatprep.subr.mxu0 %v177
      %227 = vmatpush1.msra.mxu0 %v176
      %228 = vmatprep.subr.mxu0 %v181
      %229 = vmatpush1.msra.mxu0 %v180
      %230 = vmatprep.subr.mxu0 %v185
      %231 = vmatpush1.msra.mxu0 %v184
      %232 = vmatprep.subr.mxu0 %v189
      %233 = vmatpush1.msra.mxu0 %v188
      %234 = vmatprep.subr.mxu0 %v193
      %235 = vmatpush1.msra.mxu0 %v192
      %236 = vmatprep.subr.mxu0 %v197
      %237 = vmatpush1.msra.mxu0 %v196
      %238 = vmatprep.subr.mxu0 %v201
      %239 = vmatpush1.msra.mxu0 %v200
      %240 = vmatprep.subr.mxu0 %v205
      %241 = vmatpush1.msra.mxu0 %v204
      %242 = vmatprep.subr.mxu0 %v209
      %243 = vmatpush1.msra.mxu0 %v208
      %244 = vmatprep.subr.mxu0 0.0
      %245 = vmatpush1.msra.mxu0 0.0
      %246 = vmatprep.subr.mxu0 0.0
      %247 = vmatpush1.msra.mxu0 0.0
      %248 = vmatprep.subr.mxu0 0.0
      %249 = vmatpush1.msra.mxu0 0.0
      %250 = vmatprep.subr.mxu0 0.0
      %251 = vmatpush1.msra.mxu0 0.0
      %252 = vmatprep.subr.mxu0 0.0
      %253 = vmatpush1.msra.mxu0 0.0
      %254 = vmatprep.subr.mxu0 0.0
      %255 = vmatpush1.msra.mxu0 0.0
      %256 = vmatprep.subr.mxu0 0.0
      %257 = vmatpush1.msra.mxu0 0.0
      %258 = vmatprep.subr.mxu0 0.0
      %259 = vmatpush1.msra.mxu0 0.0
      %260 = vmatprep.subr.mxu0 0.0
      %261 = vmatpush1.msra.mxu0 0.0
      %262 = vmatprep.subr.mxu0 0.0
      %263 = vmatpush1.msra.mxu0 0.0
      %264 = vmatprep.subr.mxu0 0.0
      %265 = vmatpush1.msra.mxu0 0.0
      %266 = vmatprep.subr.mxu0 0.0
      %267 = vmatpush1.msra.mxu0 0.0
      %268 = vmatprep.subr.mxu0 0.0
      %269 = vmatpush1.msra.mxu0 0.0
      %270 = vmatprep.subr.mxu0 0.0
      %271 = vmatpush1.msra.mxu0 0.0
      %272 = vmatprep.subr.mxu0 0.0
      %273 = vmatpush1.msra.mxu0 0.0
      %274 = vmatprep.subr.mxu0 0.0
      %275 = vmatpush1.msra.mxu0 0.0
      %276 = vmatprep.mubr.f32.mxu0 0.0
      %277 = vmatmul.mubr.f32.gmra.mrb[0].mxu0 %v147
      %v278 = vpop.f32.mrb[0].mxu0
      %v279 = vadd.f32 0.0, %v278
      %v280 = vpop.f32.mrb[0].mxu0
      %v281 = vadd.f32 0.0, %v280
      %282 = vdwg.mxu0
      %283 = vmatprep.subr.mxu0 %v151
      %284 = vmatpush1.msra.mxu0 %v150
      %285 = vmatprep.subr.mxu0 %v155
      %286 = vmatpush1.msra.mxu0 %v154
      %287 = vmatprep.subr.mxu0 %v159
      %288 = vmatpush1.msra.mxu0 %v158
      %289 = vmatprep.subr.mxu0 %v163
      %290 = vmatpush1.msra.mxu0 %v162
      %291 = vmatprep.subr.mxu0 %v167
      %292 = vmatpush1.msra.mxu0 %v166
      %293 = vmatprep.subr.mxu0 %v171
      %294 = vmatpush1.msra.mxu0 %v170
      %295 = vmatprep.subr.mxu0 %v175
      %296 = vmatpush1.msra.mxu0 %v174
      %297 = vmatprep.subr.mxu0 %v179
      %298 = vmatpush1.msra.mxu0 %v178
      %299 = vmatprep.subr.mxu0 %v183
      %300 = vmatpush1.msra.mxu0 %v182
      %301 = vmatprep.subr.mxu0 %v187
      %302 = vmatpush1.msra.mxu0 %v186
      %303 = vmatprep.subr.mxu0 %v191
      %304 = vmatpush1.msra.mxu0 %v190
      %305 = vmatprep.subr.mxu0 %v195
      %306 = vmatpush1.msra.mxu0 %v194
      %307 = vmatprep.subr.mxu0 %v199
      %308 = vmatpush1.msra.mxu0 %v198
      %309 = vmatprep.subr.mxu0 %v203
      %310 = vmatpush1.msra.mxu0 %v202
      %311 = vmatprep.subr.mxu0 %v207
      %312 = vmatpush1.msra.mxu0 %v206
      %313 = vmatprep.subr.mxu0 %v211
      %314 = vmatpush1.msra.mxu0 %v210
      %315 = vmatprep.subr.mxu0 0.0
      %316 = vmatpush1.msra.mxu0 0.0
      %317 = vmatprep.subr.mxu0 0.0
      %318 = vmatpush1.msra.mxu0 0.0
      %319 = vmatprep.subr.mxu0 0.0
      %320 = vmatpush1.msra.mxu0 0.0
      %321 = vmatprep.subr.mxu0 0.0
      %322 = vmatpush1.msra.mxu0 0.0
      %323 = vmatprep.subr.mxu0 0.0
      %324 = vmatpush1.msra.mxu0 0.0
      %325 = vmatprep.subr.mxu0 0.0
      %326 = vmatpush1.msra.mxu0 0.0
      %327 = vmatprep.subr.mxu0 0.0
      %328 = vmatpush1.msra.mxu0 0.0
      %329 = vmatprep.subr.mxu0 0.0
      %330 = vmatpush1.msra.mxu0 0.0
      %331 = vmatprep.subr.mxu0 0.0
      %332 = vmatpush1.msra.mxu0 0.0
      %333 = vmatprep.subr.mxu0 0.0
      %334 = vmatpush1.msra.mxu0 0.0
      %335 = vmatprep.subr.mxu0 0.0
      %336 = vmatpush1.msra.mxu0 0.0
      %337 = vmatprep.subr.mxu0 0.0
      %338 = vmatpush1.msra.mxu0 0.0
      %339 = vmatprep.subr.mxu0 0.0
      %340 = vmatpush1.msra.mxu0 0.0
      %341 = vmatprep.subr.mxu0 0.0
      %342 = vmatpush1.msra.mxu0 0.0
      %343 = vmatprep.subr.mxu0 0.0
      %344 = vmatpush1.msra.mxu0 0.0
      %345 = vmatprep.subr.mxu0 0.0
      %346 = vmatpush1.msra.mxu0 0.0
      %347 = vmatprep.mubr.f32.mxu0 0.0
      %348 = vmatmul.mubr.f32.gmra.mrb[0].mxu0 %v147
      %v349 = vpop.f32.mrb[0].mxu0
      %v350 = vadd.f32 0.0, %v349
      %v351 = vpop.f32.mrb[0].mxu0
      %v352 = vadd.f32 0.0, %v351
      %353 = vdwg.mxu0
      %354 = vmatprep.subr.mxu0 %v84
      %355 = vmatpush1.msra.mxu0 %v83
      %356 = vmatprep.subr.mxu0 %v88
      %357 = vmatpush1.msra.mxu0 %v87
      %358 = vmatprep.subr.mxu0 %v92
      %359 = vmatpush1.msra.mxu0 %v91
      %360 = vmatprep.subr.mxu0 %v96
      %361 = vmatpush1.msra.mxu0 %v95
      %362 = vmatprep.subr.mxu0 %v100
      %363 = vmatpush1.msra.mxu0 %v99
      %364 = vmatprep.subr.mxu0 %v104
      %365 = vmatpush1.msra.mxu0 %v103
      %366 = vmatprep.subr.mxu0 %v108
      %367 = vmatpush1.msra.mxu0 %v107
      %368 = vmatprep.subr.mxu0 %v112
      %369 = vmatpush1.msra.mxu0 %v111
      %370 = vmatprep.subr.mxu0 %v116
      %371 = vmatpush1.msra.mxu0 %v115
      %372 = vmatprep.subr.mxu0 %v120
      %373 = vmatpush1.msra.mxu0 %v119
      %374 = vmatprep.subr.mxu0 %v124
      %375 = vmatpush1.msra.mxu0 %v123
      %376 = vmatprep.subr.mxu0 %v128
      %377 = vmatpush1.msra.mxu0 %v127
      %378 = vmatprep.subr.mxu0 %v132
      %379 = vmatpush1.msra.mxu0 %v131
      %380 = vmatprep.subr.mxu0 %v136
      %381 = vmatpush1.msra.mxu0 %v135
      %382 = vmatprep.subr.mxu0 %v140
      %383 = vmatpush1.msra.mxu0 %v139
      %384 = vmatprep.subr.mxu0 %v144
      %385 = vmatpush1.msra.mxu0 %v143
      %386 = vmatprep.subr.mxu0 0.0
      %387 = vmatpush1.msra.mxu0 0.0
      %388 = vmatprep.subr.mxu0 0.0
      %389 = vmatpush1.msra.mxu0 0.0
      %390 = vmatprep.subr.mxu0 0.0
      %391 = vmatpush1.msra.mxu0 0.0
      %392 = vmatprep.subr.mxu0 0.0
      %393 = vmatpush1.msra.mxu0 0.0
      %394 = vmatprep.subr.mxu0 0.0
      %395 = vmatpush1.msra.mxu0 0.0
      %396 = vmatprep.subr.mxu0 0.0
      %397 = vmatpush1.msra.mxu0 0.0
      %398 = vmatprep.subr.mxu0 0.0
      %399 = vmatpush1.msra.mxu0 0.0
      %400 = vmatprep.subr.mxu0 0.0
      %401 = vmatpush1.msra.mxu0 0.0
      %402 = vmatprep.subr.mxu0 0.0
      %403 = vmatpush1.msra.mxu0 0.0
      %404 = vmatprep.subr.mxu0 0.0
      %405 = vmatpush1.msra.mxu0 0.0
      %406 = vmatprep.subr.mxu0 0.0
      %407 = vmatpush1.msra.mxu0 0.0
      %408 = vmatprep.subr.mxu0 0.0
      %409 = vmatpush1.msra.mxu0 0.0
      %410 = vmatprep.subr.mxu0 0.0
      %411 = vmatpush1.msra.mxu0 0.0
      %412 = vmatprep.subr.mxu0 0.0
      %413 = vmatpush1.msra.mxu0 0.0
      %414 = vmatprep.subr.mxu0 0.0
      %415 = vmatpush1.msra.mxu0 0.0
      %416 = vmatprep.subr.mxu0 0.0
      %417 = vmatpush1.msra.mxu0 0.0
      %418 = vmatprep.mubr.f32.mxu0 0.0
      %419 = vmatmul.mubr.f32.gmra.mrb[0].mxu0 %v82
      %v420 = vpop.f32.mrb[0].mxu0
      %v421 = vadd.f32 %v279, %v420
      %v422 = vpop.f32.mrb[0].mxu0
      %v423 = vadd.f32 %v281, %v422
      %424 = vdwg.mxu0
      %425 = vmatprep.subr.mxu0 %v86
      %426 = vmatpush1.msra.mxu0 %v85
      %427 = vmatprep.subr.mxu0 %v90
      %428 = vmatpush1.msra.mxu0 %v89
      %429 = vmatprep.subr.mxu0 %v94
      %430 = vmatpush1.msra.mxu0 %v93
      %431 = vmatprep.subr.mxu0 %v98
      %432 = vmatpush1.msra.mxu0 %v97
      %433 = vmatprep.subr.mxu0 %v102
      %434 = vmatpush1.msra.mxu0 %v101
      %435 = vmatprep.subr.mxu0 %v106
      %436 = vmatpush1.msra.mxu0 %v105
      %437 = vmatprep.subr.mxu0 %v110
      %438 = vmatpush1.msra.mxu0 %v109
      %439 = vmatprep.subr.mxu0 %v114
      %440 = vmatpush1.msra.mxu0 %v113
      %441 = vmatprep.subr.mxu0 %v118
      %442 = vmatpush1.msra.mxu0 %v117
      %443 = vmatprep.subr.mxu0 %v122
      %444 = vmatpush1.msra.mxu0 %v121
      %445 = vmatprep.subr.mxu0 %v126
      %446 = vmatpush1.msra.mxu0 %v125
      %447 = vmatprep.subr.mxu0 %v130
      %448 = vmatpush1.msra.mxu0 %v129
      %449 = vmatprep.subr.mxu0 %v134
      %450 = vmatpush1.msra.mxu0 %v133
      %451 = vmatprep.subr.mxu0 %v138
      %452 = vmatpush1.msra.mxu0 %v137
      %453 = vmatprep.subr.mxu0 %v142
      %454 = vmatpush1.msra.mxu0 %v141
      %455 = vmatprep.subr.mxu0 %v146
      %456 = vmatpush1.msra.mxu0 %v145
      %457 = vmatprep.subr.mxu0 0.0
      %458 = vmatpush1.msra.mxu0 0.0
      %459 = vmatprep.subr.mxu0 0.0
      %460 = vmatpush1.msra.mxu0 0.0
      %461 = vmatprep.subr.mxu0 0.0
      %462 = vmatpush1.msra.mxu0 0.0
      %463 = vmatprep.subr.mxu0 0.0
      %464 = vmatpush1.msra.mxu0 0.0
      %465 = vmatprep.subr.mxu0 0.0
      %466 = vmatpush1.msra.mxu0 0.0
      %467 = vmatprep.subr.mxu0 0.0
      %468 = vmatpush1.msra.mxu0 0.0
      %469 = vmatprep.subr.mxu0 0.0
      %470 = vmatpush1.msra.mxu0 0.0
      %471 = vmatprep.subr.mxu0 0.0
      %472 = vmatpush1.msra.mxu0 0.0
      %473 = vmatprep.subr.mxu0 0.0
      %474 = vmatpush1.msra.mxu0 0.0
      %475 = vmatprep.subr.mxu0 0.0
      %476 = vmatpush1.msra.mxu0 0.0
      %477 = vmatprep.subr.mxu0 0.0
      %478 = vmatpush1.msra.mxu0 0.0
      %479 = vmatprep.subr.mxu0 0.0
      %480 = vmatpush1.msra.mxu0 0.0
      %481 = vmatprep.subr.mxu0 0.0
      %482 = vmatpush1.msra.mxu0 0.0
      %483 = vmatprep.subr.mxu0 0.0
      %484 = vmatpush1.msra.mxu0 0.0
      %485 = vmatprep.subr.mxu0 0.0
      %486 = vmatpush1.msra.mxu0 0.0
      %487 = vmatprep.subr.mxu0 0.0
      %488 = vmatpush1.msra.mxu0 0.0
      %489 = vmatprep.mubr.f32.mxu0 0.0
      %490 = vmatmul.mubr.f32.gmra.mrb[0].mxu0 %v82
      %v491 = vpop.f32.mrb[0].mxu0
      %v492 = vadd.f32 %v350, %v491
      %v493 = vpop.f32.mrb[0].mxu0
      %v494 = vadd.f32 %v352, %v493
      %495 = vdwg.mxu0
      %v496 = vld [vmem:[%s3] sm:$0xf]
      %v498 = vlaneseq
      %v499 = vshrl.u32 %v498, 7
      %v500 = vsub.s32 0, %v499
      %v501 = vrot.slane %v496, %v500
      %v502 = vlaneseq
      %v503 = vshrl.u32 %v502, 7
      %v504 = vsub.s32 1, %v503
      %v505 = vrot.slane %v496, %v504
      %v506 = vlaneseq
      %v507 = vshrl.u32 %v506, 7
      %v508 = vsub.s32 2, %v507
      %v509 = vrot.slane %v496, %v508
      %v510 = vlaneseq
      %v511 = vshrl.u32 %v510, 7
      %v512 = vsub.s32 3, %v511
      %v513 = vrot.slane %v496, %v512
      %v518 = vadd.f32 %v421, %v501
      %v519 = vadd.f32 %v423, %v505
      %v520 = vadd.f32 %v492, %v509
      %v521 = vadd.f32 %v494, %v513
      %v522 = vxor.u32 %v518, 2147483648
      %v523 = vmul.f32 %v522, 1.442695
      %v524 = vpow.pop %v523
      %v525 = vadd.f32 %v524, 1.0
      %v526 = vrcp.pop %v525
      %v527 = vmul.f32 1.0, %v526
      %v528 = vxor.u32 %v519, 2147483648
      %v529 = vmul.f32 %v528, 1.442695
      %v530 = vpow.pop %v529
      %v531 = vadd.f32 %v530, 1.0
      %v532 = vrcp.pop %v531
      %v533 = vmul.f32 1.0, %v532
      %v534 = vtanh.pop %v520
      %v535 = vxor.u32 %v521, 2147483648
      %v536 = vmul.f32 %v535, 1.442695
      %v537 = vpow.pop %v536
      %v538 = vadd.f32 %v537, 1.0
      %v539 = vrcp.pop %v538
      %v540 = vmul.f32 1.0, %v539
      %v541 = vld [vmem:[#allocation11] sm:$0x3]
      %v542 = vmul.f32 %v533, %v541
      %v543 = vmul.f32 %v527, %v534
      %v544 = vadd.f32 %v542, %v543
      %545 = vst [vmem:[#allocation11] sm:$0x3] %v544
      %v546 = vtanh.pop %v544
      %v547 = vmul.f32 %v540, %v546
      %548 = vst [vmem:[#allocation9] sm:$0x3] %v547
    $region45: #{tpu_custom_call.1} parent=1 // pred_fallthru
      _
    %v549 = vld [vmem:[#allocation9] sm:$0x3]
    %v550 = vpack.c.bf16 %v549, %v549
    %551 = vst [vmem:[#allocation8] sm:$0x1] %v550
    %s552 = sadd.s32 %s77, 1
    %p553 = scmp.lt.s32.totalorder %s552, 1
    // Predicated region
    $region46: #{tpu_custom_call.1} parent=1 // pred_check
      %p554 = pneg %p553
    $region47: #{tpu_custom_call.1} parent=1 // pred_check_branch
      %556 = sbr.rel (%p554) target = $region49
    $region48: #{tpu_custom_call.1} parent=1 // pred_region
      %s557 = scalar_lea.vmem [#allocation2], 2
      %v558 = vld [vmem:[%s557] sm:$0x3]
      %v559 = vld [vmem:[#allocation5] sm:$0xff]
      %v560 = vld [vmem:[#allocation5 + $0x8] sm:$0xff]
      %v561 = vld [vmem:[#allocation5 + $0x10] sm:$0xff]
      %v562 = vld [vmem:[#allocation5 + $0x18] sm:$0xff]
      %v563 = vld [vmem:[#allocation5 + $0x20] sm:$0xff]
      %v564 = vld [vmem:[#allocation5 + $0x28] sm:$0xff]
      %v565 = vld [vmem:[#allocation5 + $0x30] sm:$0xff]
      %v566 = vld [vmem:[#allocation5 + $0x38] sm:$0xff]
      %v567 = vld [vmem:[#allocation5 + $0x40] sm:$0xff]
      %v568 = vld [vmem:[#allocation5 + $0x48] sm:$0xff]
      %v569 = vld [vmem:[#allocation5 + $0x50] sm:$0xff]
      %v570 = vld [vmem:[#allocation5 + $0x58] sm:$0xff]
      %v571 = vld [vmem:[#allocation5 + $0x60] sm:$0xff]
      %v572 = vld [vmem:[#allocation5 + $0x68] sm:$0xff]
      %v573 = vld [vmem:[#allocation5 + $0x70] sm:$0xff]
      %v574 = vld [vmem:[#allocation5 + $0x78] sm:$0xff]
      %v575 = vld [vmem:[#allocation5 + $0x80] sm:$0xff]
      %v576 = vld [vmem:[#allocation5 + $0x88] sm:$0xff]
      %v577 = vld [vmem:[#allocation5 + $0x90] sm:$0xff]
      %v578 = vld [vmem:[#allocation5 + $0x98] sm:$0xff]
      %v579 = vld [vmem:[#allocation5 + $0xa0] sm:$0xff]
      %v580 = vld [vmem:[#allocation5 + $0xa8] sm:$0xff]
      %v581 = vld [vmem:[#allocation5 + $0xb0] sm:$0xff]
      %v582 = vld [vmem:[#allocation5 + $0xb8] sm:$0xff]
      %v583 = vld [vmem:[#allocation5 + $0xc0] sm:$0xff]
      %v584 = vld [vmem:[#allocation5 + $0xc8] sm:$0xff]
      %v585 = vld [vmem:[#allocation5 + $0xd0] sm:$0xff]
      %v586 = vld [vmem:[#allocation5 + $0xd8] sm:$0xff]
      %v587 = vld [vmem:[#allocation5 + $0xe0] sm:$0xff]
      %v588 = vld [vmem:[#allocation5 + $0xe8] sm:$0xff]
      %v589 = vld [vmem:[#allocation5 + $0xf0] sm:$0xff]
      %v590 = vld [vmem:[#allocation5 + $0xf8] sm:$0xff]
      %v591 = vld [vmem:[#allocation5 + $0x100] sm:$0xff]
      %v592 = vld [vmem:[#allocation5 + $0x108] sm:$0xff]
      %v593 = vld [vmem:[#allocation5 + $0x110] sm:$0xff]
      %v594 = vld [vmem:[#allocation5 + $0x118] sm:$0xff]
      %v595 = vld [vmem:[#allocation5 + $0x120] sm:$0xff]
      %v596 = vld [vmem:[#allocation5 + $0x128] sm:$0xff]
      %v597 = vld [vmem:[#allocation5 + $0x130] sm:$0xff]
      %v598 = vld [vmem:[#allocation5 + $0x138] sm:$0xff]
      %v599 = vld [vmem:[#allocation5 + $0x140] sm:$0xff]
      %v600 = vld [vmem:[#allocation5 + $0x148] sm:$0xff]
      %v601 = vld [vmem:[#allocation5 + $0x150] sm:$0xff]
      %v602 = vld [vmem:[#allocation5 + $0x158] sm:$0xff]
      %v603 = vld [vmem:[#allocation5 + $0x160] sm:$0xff]
      %v604 = vld [vmem:[#allocation5 + $0x168] sm:$0xff]
      %v605 = vld [vmem:[#allocation5 + $0x170] sm:$0xff]
      %v606 = vld [vmem:[#allocation5 + $0x178] sm:$0xff]
      %v607 = vld [vmem:[#allocation5 + $0x180] sm:$0xff]
      %v608 = vld [vmem:[#allocation5 + $0x188] sm:$0xff]
      %v609 = vld [vmem:[#allocation5 + $0x190] sm:$0xff]
      %v610 = vld [vmem:[#allocation5 + $0x198] sm:$0xff]
      %v611 = vld [vmem:[#allocation5 + $0x1a0] sm:$0xff]
      %v612 = vld [vmem:[#allocation5 + $0x1a8] sm:$0xff]
      %v613 = vld [vmem:[#allocation5 + $0x1b0] sm:$0xff]
      %v614 = vld [vmem:[#allocation5 + $0x1b8] sm:$0xff]
      %v615 = vld [vmem:[#allocation5 + $0x1c0] sm:$0xff]
      %v616 = vld [vmem:[#allocation5 + $0x1c8] sm:$0xff]
      %v617 = vld [vmem:[#allocation5 + $0x1d0] sm:$0xff]
      %v618 = vld [vmem:[#allocation5 + $0x1d8] sm:$0xff]
      %v619 = vld [vmem:[#allocation5 + $0x1e0] sm:$0xff]
      %v620 = vld [vmem:[#allocation5 + $0x1e8] sm:$0xff]
      %v621 = vld [vmem:[#allocation5 + $0x1f0] sm:$0xff]
      %v622 = vld [vmem:[#allocation5 + $0x1f8] sm:$0xff]
      %v623 = vld [vmem:[#allocation9] sm:$0x3]
      %v624 = vld [vmem:[#allocation7] sm:$0xff]
      %v625 = vld [vmem:[#allocation7 + $0x8] sm:$0xff]
      %v626 = vld [vmem:[#allocation7 + $0x10] sm:$0xff]
      %v627 = vld [vmem:[#allocation7 + $0x18] sm:$0xff]
      %v628 = vld [vmem:[#allocation7 + $0x20] sm:$0xff]
      %v629 = vld [vmem:[#allocation7 + $0x28] sm:$0xff]
      %v630 = vld [vmem:[#allocation7 + $0x30] sm:$0xff]
      %v631 = vld [vmem:[#allocation7 + $0x38] sm:$0xff]
      %v632 = vld [vmem:[#allocation7 + $0x40] sm:$0xff]
      %v633 = vld [vmem:[#allocation7 + $0x48] sm:$0xff]
      %v634 = vld [vmem:[#allocation7 + $0x50] sm:$0xff]
      %v635 = vld [vmem:[#allocation7 + $0x58] sm:$0xff]
      %v636 = vld [vmem:[#allocation7 + $0x60] sm:$0xff]
      %v637 = vld [vmem:[#allocation7 + $0x68] sm:$0xff]
      %v638 = vld [vmem:[#allocation7 + $0x70] sm:$0xff]
      %v639 = vld [vmem:[#allocation7 + $0x78] sm:$0xff]
      %v640 = vld [vmem:[#allocation7 + $0x80] sm:$0xff]
      %v641 = vld [vmem:[#allocation7 + $0x88] sm:$0xff]
      %v642 = vld [vmem:[#allocation7 + $0x90] sm:$0xff]
      %v643 = vld [vmem:[#allocation7 + $0x98] sm:$0xff]
      %v644 = vld [vmem:[#allocation7 + $0xa0] sm:$0xff]
      %v645 = vld [vmem:[#allocation7 + $0xa8] sm:$0xff]
      %v646 = vld [vmem:[#allocation7 + $0xb0] sm:$0xff]
      %v647 = vld [vmem:[#allocation7 + $0xb8] sm:$0xff]
      %v648 = vld [vmem:[#allocation7 + $0xc0] sm:$0xff]
      %v649 = vld [vmem:[#allocation7 + $0xc8] sm:$0xff]
      %v650 = vld [vmem:[#allocation7 + $0xd0] sm:$0xff]
      %v651 = vld [vmem:[#allocation7 + $0xd8] sm:$0xff]
      %v652 = vld [vmem:[#allocation7 + $0xe0] sm:$0xff]
      %v653 = vld [vmem:[#allocation7 + $0xe8] sm:$0xff]
      %v654 = vld [vmem:[#allocation7 + $0xf0] sm:$0xff]
      %v655 = vld [vmem:[#allocation7 + $0xf8] sm:$0xff]
      %v656 = vld [vmem:[#allocation7 + $0x100] sm:$0xff]
      %v657 = vld [vmem:[#allocation7 + $0x108] sm:$0xff]
      %v658 = vld [vmem:[#allocation7 + $0x110] sm:$0xff]
      %v659 = vld [vmem:[#allocation7 + $0x118] sm:$0xff]
      %v660 = vld [vmem:[#allocation7 + $0x120] sm:$0xff]
      %v661 = vld [vmem:[#allocation7 + $0x128] sm:$0xff]
      %v662 = vld [vmem:[#allocation7 + $0x130] sm:$0xff]
      %v663 = vld [vmem:[#allocation7 + $0x138] sm:$0xff]
      %v664 = vld [vmem:[#allocation7 + $0x140] sm:$0xff]
      %v665 = vld [vmem:[#allocation7 + $0x148] sm:$0xff]
      %v666 = vld [vmem:[#allocation7 + $0x150] sm:$0xff]
      %v667 = vld [vmem:[#allocation7 + $0x158] sm:$0xff]
      %v668 = vld [vmem:[#allocation7 + $0x160] sm:$0xff]
      %v669 = vld [vmem:[#allocation7 + $0x168] sm:$0xff]
      %v670 = vld [vmem:[#allocation7 + $0x170] sm:$0xff]
      %v671 = vld [vmem:[#allocation7 + $0x178] sm:$0xff]
      %v672 = vld [vmem:[#allocation7 + $0x180] sm:$0xff]
      %v673 = vld [vmem:[#allocation7 + $0x188] sm:$0xff]
      %v674 = vld [vmem:[#allocation7 + $0x190] sm:$0xff]
      %v675 = vld [vmem:[#allocation7 + $0x198] sm:$0xff]
      %v676 = vld [vmem:[#allocation7 + $0x1a0] sm:$0xff]
      %v677 = vld [vmem:[#allocation7 + $0x1a8] sm:$0xff]
      %v678 = vld [vmem:[#allocation7 + $0x1b0] sm:$0xff]
      %v679 = vld [vmem:[#allocation7 + $0x1b8] sm:$0xff]
      %v680 = vld [vmem:[#allocation7 + $0x1c0] sm:$0xff]
      %v681 = vld [vmem:[#allocation7 + $0x1c8] sm:$0xff]
      %v682 = vld [vmem:[#allocation7 + $0x1d0] sm:$0xff]
      %v683 = vld [vmem:[#allocation7 + $0x1d8] sm:$0xff]
      %v684 = vld [vmem:[#allocation7 + $0x1e0] sm:$0xff]
      %v685 = vld [vmem:[#allocation7 + $0x1e8] sm:$0xff]
      %v686 = vld [vmem:[#allocation7 + $0x1f0] sm:$0xff]
      %v687 = vld [vmem:[#allocation7 + $0x1f8] sm:$0xff]
      %688 = vmatprep.subr.mxu0 %v625
      %689 = vmatpush1.msra.mxu0 %v624
      %690 = vmatprep.subr.mxu0 %v629
      %691 = vmatpush1.msra.mxu0 %v628
      %692 = vmatprep.subr.mxu0 %v633
      %693 = vmatpush1.msra.mxu0 %v632
      %694 = vmatprep.subr.mxu0 %v637
      %695 = vmatpush1.msra.mxu0 %v636
      %696 = vmatprep.subr.mxu0 %v641
      %697 = vmatpush1.msra.mxu0 %v640
      %698 = vmatprep.subr.mxu0 %v645
      %699 = vmatpush1.msra.mxu0 %v644
      %700 = vmatprep.subr.mxu0 %v649
      %701 = vmatpush1.msra.mxu0 %v648
      %702 = vmatprep.subr.mxu0 %v653
      %703 = vmatpush1.msra.mxu0 %v652
      %704 = vmatprep.subr.mxu0 %v657
      %705 = vmatpush1.msra.mxu0 %v656
      %706 = vmatprep.subr.mxu0 %v661
      %707 = vmatpush1.msra.mxu0 %v660
      %708 = vmatprep.subr.mxu0 %v665
      %709 = vmatpush1.msra.mxu0 %v664
      %710 = vmatprep.subr.mxu0 %v669
      %711 = vmatpush1.msra.mxu0 %v668
      %712 = vmatprep.subr.mxu0 %v673
      %713 = vmatpush1.msra.mxu0 %v672
      %714 = vmatprep.subr.mxu0 %v677
      %715 = vmatpush1.msra.mxu0 %v676
      %716 = vmatprep.subr.mxu0 %v681
      %717 = vmatpush1.msra.mxu0 %v680
      %718 = vmatprep.subr.mxu0 %v685
      %719 = vmatpush1.msra.mxu0 %v684
      %720 = vmatprep.subr.mxu0 0.0
      %721 = vmatpush1.msra.mxu0 0.0
      %722 = vmatprep.subr.mxu0 0.0
      %723 = vmatpush1.msra.mxu0 0.0
      %724 = vmatprep.subr.mxu0 0.0
      %725 = vmatpush1.msra.mxu0 0.0
      %726 = vmatprep.subr.mxu0 0.0
      %727 = vmatpush1.msra.mxu0 0.0
      %728 = vmatprep.subr.mxu0 0.0
      %729 = vmatpush1.msra.mxu0 0.0
      %730 = vmatprep.subr.mxu0 0.0
      %731 = vmatpush1.msra.mxu0 0.0
      %732 = vmatprep.subr.mxu0 0.0
      %733 = vmatpush1.msra.mxu0 0.0
      %734 = vmatprep.subr.mxu0 0.0
      %735 = vmatpush1.msra.mxu0 0.0
      %736 = vmatprep.subr.mxu0 0.0
      %737 = vmatpush1.msra.mxu0 0.0
      %738 = vmatprep.subr.mxu0 0.0
      %739 = vmatpush1.msra.mxu0 0.0
      %740 = vmatprep.subr.mxu0 0.0
      %741 = vmatpush1.msra.mxu0 0.0
      %742 = vmatprep.subr.mxu0 0.0
      %743 = vmatpush1.msra.mxu0 0.0
      %744 = vmatprep.subr.mxu0 0.0
      %745 = vmatpush1.msra.mxu0 0.0
      %746 = vmatprep.subr.mxu0 0.0
      %747 = vmatpush1.msra.mxu0 0.0
      %748 = vmatprep.subr.mxu0 0.0
      %749 = vmatpush1.msra.mxu0 0.0
      %750 = vmatprep.subr.mxu0 0.0
      %751 = vmatpush1.msra.mxu0 0.0
      %752 = vmatprep.mubr.f32.mxu0 0.0
      %753 = vmatmul.mubr.f32.gmra.mrb[0].mxu0 %v623
      %v754 = vpop.f32.mrb[0].mxu0
      %v755 = vadd.f32 0.0, %v754
      %v756 = vpop.f32.mrb[0].mxu0
      %v757 = vadd.f32 0.0, %v756
      %758 = vdwg.mxu0
      %759 = vmatprep.subr.mxu0 %v627
      %760 = vmatpush1.msra.mxu0 %v626
      %761 = vmatprep.subr.mxu0 %v631
      %762 = vmatpush1.msra.mxu0 %v630
      %763 = vmatprep.subr.mxu0 %v635
      %764 = vmatpush1.msra.mxu0 %v634
      %765 = vmatprep.subr.mxu0 %v639
      %766 = vmatpush1.msra.mxu0 %v638
      %767 = vmatprep.subr.mxu0 %v643
      %768 = vmatpush1.msra.mxu0 %v642
      %769 = vmatprep.subr.mxu0 %v647
      %770 = vmatpush1.msra.mxu0 %v646
      %771 = vmatprep.subr.mxu0 %v651
      %772 = vmatpush1.msra.mxu0 %v650
      %773 = vmatprep.subr.mxu0 %v655
      %774 = vmatpush1.msra.mxu0 %v654
      %775 = vmatprep.subr.mxu0 %v659
      %776 = vmatpush1.msra.mxu0 %v658
      %777 = vmatprep.subr.mxu0 %v663
      %778 = vmatpush1.msra.mxu0 %v662
      %779 = vmatprep.subr.mxu0 %v667
      %780 = vmatpush1.msra.mxu0 %v666
      %781 = vmatprep.subr.mxu0 %v671
      %782 = vmatpush1.msra.mxu0 %v670
      %783 = vmatprep.subr.mxu0 %v675
      %784 = vmatpush1.msra.mxu0 %v674
      %785 = vmatprep.subr.mxu0 %v679
      %786 = vmatpush1.msra.mxu0 %v678
      %787 = vmatprep.subr.mxu0 %v683
      %788 = vmatpush1.msra.mxu0 %v682
      %789 = vmatprep.subr.mxu0 %v687
      %790 = vmatpush1.msra.mxu0 %v686
      %791 = vmatprep.subr.mxu0 0.0
      %792 = vmatpush1.msra.mxu0 0.0
      %793 = vmatprep.subr.mxu0 0.0
      %794 = vmatpush1.msra.mxu0 0.0
      %795 = vmatprep.subr.mxu0 0.0
      %796 = vmatpush1.msra.mxu0 0.0
      %797 = vmatprep.subr.mxu0 0.0
      %798 = vmatpush1.msra.mxu0 0.0
      %799 = vmatprep.subr.mxu0 0.0
      %800 = vmatpush1.msra.mxu0 0.0
      %801 = vmatprep.subr.mxu0 0.0
      %802 = vmatpush1.msra.mxu0 0.0
      %803 = vmatprep.subr.mxu0 0.0
      %804 = vmatpush1.msra.mxu0 0.0
      %805 = vmatprep.subr.mxu0 0.0
      %806 = vmatpush1.msra.mxu0 0.0
      %807 = vmatprep.subr.mxu0 0.0
      %808 = vmatpush1.msra.mxu0 0.0
      %809 = vmatprep.subr.mxu0 0.0
      %810 = vmatpush1.msra.mxu0 0.0
      %811 = vmatprep.subr.mxu0 0.0
      %812 = vmatpush1.msra.mxu0 0.0
      %813 = vmatprep.subr.mxu0 0.0
      %814 = vmatpush1.msra.mxu0 0.0
      %815 = vmatprep.subr.mxu0 0.0
      %816 = vmatpush1.msra.mxu0 0.0
      %817 = vmatprep.subr.mxu0 0.0
      %818 = vmatpush1.msra.mxu0 0.0
      %819 = vmatprep.subr.mxu0 0.0
      %820 = vmatpush1.msra.mxu0 0.0
      %821 = vmatprep.subr.mxu0 0.0
      %822 = vmatpush1.msra.mxu0 0.0
      %823 = vmatprep.mubr.f32.mxu0 0.0
      %824 = vmatmul.mubr.f32.gmra.mrb[0].mxu0 %v623
      %v825 = vpop.f32.mrb[0].mxu0
      %v826 = vadd.f32 0.0, %v825
      %v827 = vpop.f32.mrb[0].mxu0
      %v828 = vadd.f32 0.0, %v827
      %829 = vdwg.mxu0
      %830 = vmatprep.subr.mxu0 %v560
      %831 = vmatpush1.msra.mxu0 %v559
      %832 = vmatprep.subr.mxu0 %v564
      %833 = vmatpush1.msra.mxu0 %v563
      %834 = vmatprep.subr.mxu0 %v568
      %835 = vmatpush1.msra.mxu0 %v567
      %836 = vmatprep.subr.mxu0 %v572
      %837 = vmatpush1.msra.mxu0 %v571
      %838 = vmatprep.subr.mxu0 %v576
      %839 = vmatpush1.msra.mxu0 %v575
      %840 = vmatprep.subr.mxu0 %v580
      %841 = vmatpush1.msra.mxu0 %v579
      %842 = vmatprep.subr.mxu0 %v584
      %843 = vmatpush1.msra.mxu0 %v583
      %844 = vmatprep.subr.mxu0 %v588
      %845 = vmatpush1.msra.mxu0 %v587
      %846 = vmatprep.subr.mxu0 %v592
      %847 = vmatpush1.msra.mxu0 %v591
      %848 = vmatprep.subr.mxu0 %v596
      %849 = vmatpush1.msra.mxu0 %v595
      %850 = vmatprep.subr.mxu0 %v600
      %851 = vmatpush1.msra.mxu0 %v599
      %852 = vmatprep.subr.mxu0 %v604
      %853 = vmatpush1.msra.mxu0 %v603
      %854 = vmatprep.subr.mxu0 %v608
      %855 = vmatpush1.msra.mxu0 %v607
      %856 = vmatprep.subr.mxu0 %v612
      %857 = vmatpush1.msra.mxu0 %v611
      %858 = vmatprep.subr.mxu0 %v616
      %859 = vmatpush1.msra.mxu0 %v615
      %860 = vmatprep.subr.mxu0 %v620
      %861 = vmatpush1.msra.mxu0 %v619
      %862 = vmatprep.subr.mxu0 0.0
      %863 = vmatpush1.msra.mxu0 0.0
      %864 = vmatprep.subr.mxu0 0.0
      %865 = vmatpush1.msra.mxu0 0.0
      %866 = vmatprep.subr.mxu0 0.0
      %867 = vmatpush1.msra.mxu0 0.0
      %868 = vmatprep.subr.mxu0 0.0
      %869 = vmatpush1.msra.mxu0 0.0
      %870 = vmatprep.subr.mxu0 0.0
      %871 = vmatpush1.msra.mxu0 0.0
      %872 = vmatprep.subr.mxu0 0.0
      %873 = vmatpush1.msra.mxu0 0.0
      %874 = vmatprep.subr.mxu0 0.0
      %875 = vmatpush1.msra.mxu0 0.0
      %876 = vmatprep.subr.mxu0 0.0
      %877 = vmatpush1.msra.mxu0 0.0
      %878 = vmatprep.subr.mxu0 0.0
      %879 = vmatpush1.msra.mxu0 0.0
      %880 = vmatprep.subr.mxu0 0.0
      %881 = vmatpush1.msra.mxu0 0.0
      %882 = vmatprep.subr.mxu0 0.0
      %883 = vmatpush1.msra.mxu0 0.0
      %884 = vmatprep.subr.mxu0 0.0
      %885 = vmatpush1.msra.mxu0 0.0
      %886 = vmatprep.subr.mxu0 0.0
      %887 = vmatpush1.msra.mxu0 0.0
      %888 = vmatprep.subr.mxu0 0.0
      %889 = vmatpush1.msra.mxu0 0.0
      %890 = vmatprep.subr.mxu0 0.0
      %891 = vmatpush1.msra.mxu0 0.0
      %892 = vmatprep.subr.mxu0 0.0
      %893 = vmatpush1.msra.mxu0 0.0
      %894 = vmatprep.mubr.f32.mxu0 0.0
      %895 = vmatmul.mubr.f32.gmra.mrb[0].mxu0 %v558
      %v896 = vpop.f32.mrb[0].mxu0
      %v897 = vadd.f32 %v755, %v896
      %v898 = vpop.f32.mrb[0].mxu0
      %v899 = vadd.f32 %v757, %v898
      %900 = vdwg.mxu0
      %901 = vmatprep.subr.mxu0 %v562
      %902 = vmatpush1.msra.mxu0 %v561
      %903 = vmatprep.subr.mxu0 %v566
      %904 = vmatpush1.msra.mxu0 %v565
      %905 = vmatprep.subr.mxu0 %v570
      %906 = vmatpush1.msra.mxu0 %v569
      %907 = vmatprep.subr.mxu0 %v574
      %908 = vmatpush1.msra.mxu0 %v573
      %909 = vmatprep.subr.mxu0 %v578
      %910 = vmatpush1.msra.mxu0 %v577
      %911 = vmatprep.subr.mxu0 %v582
      %912 = vmatpush1.msra.mxu0 %v581
      %913 = vmatprep.subr.mxu0 %v586
      %914 = vmatpush1.msra.mxu0 %v585
      %915 = vmatprep.subr.mxu0 %v590
      %916 = vmatpush1.msra.mxu0 %v589
      %917 = vmatprep.subr.mxu0 %v594
      %918 = vmatpush1.msra.mxu0 %v593
      %919 = vmatprep.subr.mxu0 %v598
      %920 = vmatpush1.msra.mxu0 %v597
      %921 = vmatprep.subr.mxu0 %v602
      %922 = vmatpush1.msra.mxu0 %v601
      %923 = vmatprep.subr.mxu0 %v606
      %924 = vmatpush1.msra.mxu0 %v605
      %925 = vmatprep.subr.mxu0 %v610
      %926 = vmatpush1.msra.mxu0 %v609
      %927 = vmatprep.subr.mxu0 %v614
      %928 = vmatpush1.msra.mxu0 %v613
      %929 = vmatprep.subr.mxu0 %v618
      %930 = vmatpush1.msra.mxu0 %v617
      %931 = vmatprep.subr.mxu0 %v622
      %932 = vmatpush1.msra.mxu0 %v621
      %933 = vmatprep.subr.mxu0 0.0
      %934 = vmatpush1.msra.mxu0 0.0
      %935 = vmatprep.subr.mxu0 0.0
      %936 = vmatpush1.msra.mxu0 0.0
      %937 = vmatprep.subr.mxu0 0.0
      %938 = vmatpush1.msra.mxu0 0.0
      %939 = vmatprep.subr.mxu0 0.0
      %940 = vmatpush1.msra.mxu0 0.0
      %941 = vmatprep.subr.mxu0 0.0
      %942 = vmatpush1.msra.mxu0 0.0
      %943 = vmatprep.subr.mxu0 0.0
      %944 = vmatpush1.msra.mxu0 0.0
      %945 = vmatprep.subr.mxu0 0.0
      %946 = vmatpush1.msra.mxu0 0.0
      %947 = vmatprep.subr.mxu0 0.0
      %948 = vmatpush1.msra.mxu0 0.0
      %949 = vmatprep.subr.mxu0 0.0
      %950 = vmatpush1.msra.mxu0 0.0
      %951 = vmatprep.subr.mxu0 0.0
      %952 = vmatpush1.msra.mxu0 0.0
      %953 = vmatprep.subr.mxu0 0.0
      %954 = vmatpush1.msra.mxu0 0.0
      %955 = vmatprep.subr.mxu0 0.0
      %956 = vmatpush1.msra.mxu0 0.0
      %957 = vmatprep.subr.mxu0 0.0
      %958 = vmatpush1.msra.mxu0 0.0
      %959 = vmatprep.subr.mxu0 0.0
      %960 = vmatpush1.msra.mxu0 0.0
      %961 = vmatprep.subr.mxu0 0.0
      %962 = vmatpush1.msra.mxu0 0.0
      %963 = vmatprep.subr.mxu0 0.0
      %964 = vmatpush1.msra.mxu0 0.0
      %965 = vmatprep.mubr.f32.mxu0 0.0
      %966 = vmatmul.mubr.f32.gmra.mrb[0].mxu0 %v558
      %v967 = vpop.f32.mrb[0].mxu0
      %v968 = vadd.f32 %v826, %v967
      %v969 = vpop.f32.mrb[0].mxu0
      %v970 = vadd.f32 %v828, %v969
      %971 = vdwg.mxu0
      %v972 = vld [vmem:[%s3] sm:$0xf]
      %v974 = vlaneseq
      %v975 = vshrl.u32 %v974, 7
      %v976 = vsub.s32 0, %v975
      %v977 = vrot.slane %v972, %v976
      %v978 = vlaneseq
      %v979 = vshrl.u32 %v978, 7
      %v980 = vsub.s32 1, %v979
      %v981 = vrot.slane %v972, %v980
      %v982 = vlaneseq
      %v983 = vshrl.u32 %v982, 7
      %v984 = vsub.s32 2, %v983
      %v985 = vrot.slane %v972, %v984
      %v986 = vlaneseq
      %v987 = vshrl.u32 %v986, 7
      %v988 = vsub.s32 3, %v987
      %v989 = vrot.slane %v972, %v988
      %v994 = vadd.f32 %v897, %v977
      %v995 = vadd.f32 %v899, %v981
      %v996 = vadd.f32 %v968, %v985
      %v997 = vadd.f32 %v970, %v989
      %v998 = vxor.u32 %v994, 2147483648
      %v999 = vmul.f32 %v998, 1.442695
      %v1000 = vpow.pop %v999
      %v1001 = vadd.f32 %v1000, 1.0
      %v1002 = vrcp.pop %v1001
      %v1003 = vmul.f32 1.0, %v1002
      %v1004 = vxor.u32 %v995, 2147483648
      %v1005 = vmul.f32 %v1004, 1.442695
      %v1006 = vpow.pop %v1005
      %v1007 = vadd.f32 %v1006, 1.0
      %v1008 = vrcp.pop %v1007
      %v1009 = vmul.f32 1.0, %v1008
      %v1010 = vtanh.pop %v996
      %v1011 = vxor.u32 %v997, 2147483648
      %v1012 = vmul.f32 %v1011, 1.442695
      %v1013 = vpow.pop %v1012
      %v1014 = vadd.f32 %v1013, 1.0
      %v1015 = vrcp.pop %v1014
      %v1016 = vmul.f32 1.0, %v1015
      %v1017 = vld [vmem:[#allocation11] sm:$0x3]
      %v1018 = vmul.f32 %v1009, %v1017
      %v1019 = vmul.f32 %v1003, %v1010
      %v1020 = vadd.f32 %v1018, %v1019
      %1021 = vst [vmem:[#allocation11] sm:$0x3] %v1020
      %v1022 = vtanh.pop %v1020
      %v1023 = vmul.f32 %v1016, %v1022
      %1024 = vst [vmem:[#allocation9] sm:$0x3] %v1023
    $region49: #{tpu_custom_call.1} parent=1 // pred_fallthru
      _
    %v1025 = vld [vmem:[#allocation9] sm:$0x3]
    %v1026 = vpack.c.bf16 %v1025, %v1025
    %v1028 = vunpack.c.l.b16 %v1026
    %v1029 = vpack.c.b16 %v1028, %v1028
    %v1030 = vrot.slane %v1029, 7
    %1032 = vst [vmem:[#allocation8] sm:$0x2] %v1030
    %s1033 = sadd.s32 %s77, 2
    %p1034 = scmp.lt.s32.totalorder %s1033, 1
    // Predicated region
    $region50: #{tpu_custom_call.1} parent=1 // pred_check
      %p1035 = pneg %p1034
    $region51: #{tpu_custom_call.1} parent=1 // pred_check_branch
      %1037 = sbr.rel (%p1035) target = $region53
    $region52: #{tpu_custom_call.1} parent=1 // pred_region
      %s1038 = scalar_lea.vmem [#allocation2], 4
      %v1039 = vld [vmem:[%s1038] sm:$0x3]
      %v1040 = vld [vmem:[#allocation5] sm:$0xff]
      %v1041 = vld [vmem:[#allocation5 + $0x8] sm:$0xff]
      %v1042 = vld [vmem:[#allocation5 + $0x10] sm:$0xff]
      %v1043 = vld [vmem:[#allocation5 + $0x18] sm:$0xff]
      %v1044 = vld [vmem:[#allocation5 + $0x20] sm:$0xff]
      %v1045 = vld [vmem:[#allocation5 + $0x28] sm:$0xff]
      %v1046 = vld [vmem:[#allocation5 + $0x30] sm:$0xff]
      %v1047 = vld [vmem:[#allocation5 + $0x38] sm:$0xff]
      %v1048 = vld [vmem:[#allocation5 + $0x40] sm:$0xff]
      %v1049 = vld [vmem:[#allocation5 + $0x48] sm:$0xff]
      %v1050 = vld [vmem:[#allocation5 + $0x50] sm:$0xff]
      %v1051 = vld [vmem:[#allocation5 + $0x58] sm:$0xff]
      %v1052 = vld [vmem:[#allocation5 + $0x60] sm:$0xff]
      %v1053 = vld [vmem:[#allocation5 + $0x68] sm:$0xff]
      %v1054 = vld [vmem:[#allocation5 + $0x70] sm:$0xff]
      %v1055 = vld [vmem:[#allocation5 + $0x78] sm:$0xff]
      %v1056 = vld [vmem:[#allocation5 + $0x80] sm:$0xff]
      %v1057 = vld [vmem:[#allocation5 + $0x88] sm:$0xff]
      %v1058 = vld [vmem:[#allocation5 + $0x90] sm:$0xff]
      %v1059 = vld [vmem:[#allocation5 + $0x98] sm:$0xff]
      %v1060 = vld [vmem:[#allocation5 + $0xa0] sm:$0xff]
      %v1061 = vld [vmem:[#allocation5 + $0xa8] sm:$0xff]
      %v1062 = vld [vmem:[#allocation5 + $0xb0] sm:$0xff]
      %v1063 = vld [vmem:[#allocation5 + $0xb8] sm:$0xff]
      %v1064 = vld [vmem:[#allocation5 + $0xc0] sm:$0xff]
      %v1065 = vld [vmem:[#allocation5 + $0xc8] sm:$0xff]
      %v1066 = vld [vmem:[#allocation5 + $0xd0] sm:$0xff]
      %v1067 = vld [vmem:[#allocation5 + $0xd8] sm:$0xff]
      %v1068 = vld [vmem:[#allocation5 + $0xe0] sm:$0xff]
      %v1069 = vld [vmem:[#allocation5 + $0xe8] sm:$0xff]
      %v1070 = vld [vmem:[#allocation5 + $0xf0] sm:$0xff]
      %v1071 = vld [vmem:[#allocation5 + $0xf8] sm:$0xff]
      %v1072 = vld [vmem:[#allocation5 + $0x100] sm:$0xff]
      %v1073 = vld [vmem:[#allocation5 + $0x108] sm:$0xff]
      %v1074 = vld [vmem:[#allocation5 + $0x110] sm:$0xff]
      %v1075 = vld [vmem:[#allocation5 + $0x118] sm:$0xff]
      %v1076 = vld [vmem:[#allocation5 + $0x120] sm:$0xff]
      %v1077 = vld [vmem:[#allocation5 + $0x128] sm:$0xff]
      %v1078 = vld [vmem:[#allocation5 + $0x130] sm:$0xff]
      %v1079 = vld [vmem:[#allocation5 + $0x138] sm:$0xff]
      %v1080 = vld [vmem:[#allocation5 + $0x140] sm:$0xff]
      %v1081 = vld [vmem:[#allocation5 + $0x148] sm:$0xff]
      %v1082 = vld [vmem:[#allocation5 + $0x150] sm:$0xff]
      %v1083 = vld [vmem:[#allocation5 + $0x158] sm:$0xff]
      %v1084 = vld [vmem:[#allocation5 + $0x160] sm:$0xff]
      %v1085 = vld [vmem:[#allocation5 + $0x168] sm:$0xff]
      %v1086 = vld [vmem:[#allocation5 + $0x170] sm:$0xff]
      %v1087 = vld [vmem:[#allocation5 + $0x178] sm:$0xff]
      %v1088 = vld [vmem:[#allocation5 + $0x180] sm:$0xff]
      %v1089 = vld [vmem:[#allocation5 + $0x188] sm:$0xff]
      %v1090 = vld [vmem:[#allocation5 + $0x190] sm:$0xff]
      %v1091 = vld [vmem:[#allocation5 + $0x198] sm:$0xff]
      %v1092 = vld [vmem:[#allocation5 + $0x1a0] sm:$0xff]
      %v1093 = vld [vmem:[#allocation5 + $0x1a8] sm:$0xff]
      %v1094 = vld [vmem:[#allocation5 + $0x1b0] sm:$0xff]
      %v1095 = vld [vmem:[#allocation5 + $0x1b8] sm:$0xff]
      %v1096 = vld [vmem:[#allocation5 + $0x1c0] sm:$0xff]
      %v1097 = vld [vmem:[#allocation5 + $0x1c8] sm:$0xff]
      %v1098 = vld [vmem:[#allocation5 + $0x1d0] sm:$0xff]
      %v1099 = vld [vmem:[#allocation5 + $0x1d8] sm:$0xff]
      %v1100 = vld [vmem:[#allocation5 + $0x1e0] sm:$0xff]
      %v1101 = vld [vmem:[#allocation5 + $0x1e8] sm:$0xff]
      %v1102 = vld [vmem:[#allocation5 + $0x1f0] sm:$0xff]
      %v1103 = vld [vmem:[#allocation5 + $0x1f8] sm:$0xff]
      %v1104 = vld [vmem:[#allocation9] sm:$0x3]
      %v1105 = vld [vmem:[#allocation7] sm:$0xff]
      %v1106 = vld [vmem:[#allocation7 + $0x8] sm:$0xff]
      %v1107 = vld [vmem:[#allocation7 + $0x10] sm:$0xff]
      %v1108 = vld [vmem:[#allocation7 + $0x18] sm:$0xff]
      %v1109 = vld [vmem:[#allocation7 + $0x20] sm:$0xff]
      %v1110 = vld [vmem:[#allocation7 + $0x28] sm:$0xff]
      %v1111 = vld [vmem:[#allocation7 + $0x30] sm:$0xff]
      %v1112 = vld [vmem:[#allocation7 + $0x38] sm:$0xff]
      %v1113 = vld [vmem:[#allocation7 + $0x40] sm:$0xff]
      %v1114 = vld [vmem:[#allocation7 + $0x48] sm:$0xff]
      %v1115 = vld [vmem:[#allocation7 + $0x50] sm:$0xff]
      %v1116 = vld [vmem:[#allocation7 + $0x58] sm:$0xff]
      %v1117 = vld [vmem:[#allocation7 + $0x60] sm:$0xff]
      %v1118 = vld [vmem:[#allocation7 + $0x68] sm:$0xff]
      %v1119 = vld [vmem:[#allocation7 + $0x70] sm:$0xff]
      %v1120 = vld [vmem:[#allocation7 + $0x78] sm:$0xff]
      %v1121 = vld [vmem:[#allocation7 + $0x80] sm:$0xff]
      %v1122 = vld [vmem:[#allocation7 + $0x88] sm:$0xff]
      %v1123 = vld [vmem:[#allocation7 + $0x90] sm:$0xff]
      %v1124 = vld [vmem:[#allocation7 + $0x98] sm:$0xff]
      %v1125 = vld [vmem:[#allocation7 + $0xa0] sm:$0xff]
      %v1126 = vld [vmem:[#allocation7 + $0xa8] sm:$0xff]
      %v1127 = vld [vmem:[#allocation7 + $0xb0] sm:$0xff]
      %v1128 = vld [vmem:[#allocation7 + $0xb8] sm:$0xff]
      %v1129 = vld [vmem:[#allocation7 + $0xc0] sm:$0xff]
      %v1130 = vld [vmem:[#allocation7 + $0xc8] sm:$0xff]
      %v1131 = vld [vmem:[#allocation7 + $0xd0] sm:$0xff]
      %v1132 = vld [vmem:[#allocation7 + $0xd8] sm:$0xff]
      %v1133 = vld [vmem:[#allocation7 + $0xe0] sm:$0xff]
      %v1134 = vld [vmem:[#allocation7 + $0xe8] sm:$0xff]
      %v1135 = vld [vmem:[#allocation7 + $0xf0] sm:$0xff]
      %v1136 = vld [vmem:[#allocation7 + $0xf8] sm:$0xff]
      %v1137 = vld [vmem:[#allocation7 + $0x100] sm:$0xff]
      %v1138 = vld [vmem:[#allocation7 + $0x108] sm:$0xff]
      %v1139 = vld [vmem:[#allocation7 + $0x110] sm:$0xff]
      %v1140 = vld [vmem:[#allocation7 + $0x118] sm:$0xff]
      %v1141 = vld [vmem:[#allocation7 + $0x120] sm:$0xff]
      %v1142 = vld [vmem:[#allocation7 + $0x128] sm:$0xff]
      %v1143 = vld [vmem:[#allocation7 + $0x130] sm:$0xff]
      %v1144 = vld [vmem:[#allocation7 + $0x138] sm:$0xff]
      %v1145 = vld [vmem:[#allocation7 + $0x140] sm:$0xff]
      %v1146 = vld [vmem:[#allocation7 + $0x148] sm:$0xff]
      %v1147 = vld [vmem:[#allocation7 + $0x150] sm:$0xff]
      %v1148 = vld [vmem:[#allocation7 + $0x158] sm:$0xff]
      %v1149 = vld [vmem:[#allocation7 + $0x160] sm:$0xff]
      %v1150 = vld [vmem:[#allocation7 + $0x168] sm:$0xff]
      %v1151 = vld [vmem:[#allocation7 + $0x170] sm:$0xff]
      %v1152 = vld [vmem:[#allocation7 + $0x178] sm:$0xff]
      %v1153 = vld [vmem:[#allocation7 + $0x180] sm:$0xff]
      %v1154 = vld [vmem:[#allocation7 + $0x188] sm:$0xff]
      %v1155 = vld [vmem:[#allocation7 + $0x190] sm:$0xff]
      %v1156 = vld [vmem:[#allocation7 + $0x198] sm:$0xff]
      %v1157 = vld [vmem:[#allocation7 + $0x1a0] sm:$0xff]
      %v1158 = vld [vmem:[#allocation7 + $0x1a8] sm:$0xff]
      %v1159 = vld [vmem:[#allocation7 + $0x1b0] sm:$0xff]
      %v1160 = vld [vmem:[#allocation7 + $0x1b8] sm:$0xff]
      %v1161 = vld [vmem:[#allocation7 + $0x1c0] sm:$0xff]
      %v1162 = vld [vmem:[#allocation7 + $0x1c8] sm:$0xff]
      %v1163 = vld [vmem:[#allocation7 + $0x1d0] sm:$0xff]
      %v1164 = vld [vmem:[#allocation7 + $0x1d8] sm:$0xff]
      %v1165 = vld [vmem:[#allocation7 + $0x1e0] sm:$0xff]
      %v1166 = vld [vmem:[#allocation7 + $0x1e8] sm:$0xff]
      %v1167 = vld [vmem:[#allocation7 + $0x1f0] sm:$0xff]
      %v1168 = vld [vmem:[#allocation7 + $0x1f8] sm:$0xff]
      %1169 = vmatprep.subr.mxu0 %v1106
      %1170 = vmatpush1.msra.mxu0 %v1105
      %1171 = vmatprep.subr.mxu0 %v1110
      %1172 = vmatpush1.msra.mxu0 %v1109
      %1173 = vmatprep.subr.mxu0 %v1114
      %1174 = vmatpush1.msra.mxu0 %v1113
      %1175 = vmatprep.subr.mxu0 %v1118
      %1176 = vmatpush1.msra.mxu0 %v1117
      %1177 = vmatprep.subr.mxu0 %v1122
      %1178 = vmatpush1.msra.mxu0 %v1121
      %1179 = vmatprep.subr.mxu0 %v1126
      %1180 = vmatpush1.msra.mxu0 %v1125
      %1181 = vmatprep.subr.mxu0 %v1130
      %1182 = vmatpush1.msra.mxu0 %v1129
      %1183 = vmatprep.subr.mxu0 %v1134
      %1184 = vmatpush1.msra.mxu0 %v1133
      %1185 = vmatprep.subr.mxu0 %v1138
      %1186 = vmatpush1.msra.mxu0 %v1137
      %1187 = vmatprep.subr.mxu0 %v1142
      %1188 = vmatpush1.msra.mxu0 %v1141
      %1189 = vmatprep.subr.mxu0 %v1146
      %1190 = vmatpush1.msra.mxu0 %v1145
      %1191 = vmatprep.subr.mxu0 %v1150
      %1192 = vmatpush1.msra.mxu0 %v1149
      %1193 = vmatprep.subr.mxu0 %v1154
      %1194 = vmatpush1.msra.mxu0 %v1153
      %1195 = vmatprep.subr.mxu0 %v1158
      %1196 = vmatpush1.msra.mxu0 %v1157
      %1197 = vmatprep.subr.mxu0 %v1162
      %1198 = vmatpush1.msra.mxu0 %v1161
      %1199 = vmatprep.subr.mxu0 %v1166
      %1200 = vmatpush1.msra.mxu0 %v1165
      %1201 = vmatprep.subr.mxu0 0.0
      %1202 = vmatpush1.msra.mxu0 0.0
      %1203 = vmatprep.subr.mxu0 0.0
      %1204 = vmatpush1.msra.mxu0 0.0
      %1205 = vmatprep.subr.mxu0 0.0
      %1206 = vmatpush1.msra.mxu0 0.0
      %1207 = vmatprep.subr.mxu0 0.0
      %1208 = vmatpush1.msra.mxu0 0.0
      %1209 = vmatprep.subr.mxu0 0.0
      %1210 = vmatpush1.msra.mxu0 0.0
      %1211 = vmatprep.subr.mxu0 0.0
      %1212 = vmatpush1.msra.mxu0 0.0
      %1213 = vmatprep.subr.mxu0 0.0
      %1214 = vmatpush1.msra.mxu0 0.0
      %1215 = vmatprep.subr.mxu0 0.0
      %1216 = vmatpush1.msra.mxu0 0.0
      %1217 = vmatprep.subr.mxu0 0.0
      %1218 = vmatpush1.msra.mxu0 0.0
      %1219 = vmatprep.subr.mxu0 0.0
      %1220 = vmatpush1.msra.mxu0 0.0
      %1221 = vmatprep.subr.mxu0 0.0
      %1222 = vmatpush1.msra.mxu0 0.0
      %1223 = vmatprep.subr.mxu0 0.0
      %1224 = vmatpush1.msra.mxu0 0.0
      %1225 = vmatprep.subr.mxu0 0.0
      %1226 = vmatpush1.msra.mxu0 0.0
      %1227 = vmatprep.subr.mxu0 0.0
      %1228 = vmatpush1.msra.mxu0 0.0
      %1229 = vmatprep.subr.mxu0 0.0
      %1230 = vmatpush1.msra.mxu0 0.0
      %1231 = vmatprep.subr.mxu0 0.0
      %1232 = vmatpush1.msra.mxu0 0.0
      %1233 = vmatprep.mubr.f32.mxu0 0.0
      %1234 = vmatmul.mubr.f32.gmra.mrb[0].mxu0 %v1104
      %v1235 = vpop.f32.mrb[0].mxu0
      %v1236 = vadd.f32 0.0, %v1235
      %v1237 = vpop.f32.mrb[0].mxu0
      %v1238 = vadd.f32 0.0, %v1237
      %1239 = vdwg.mxu0
      %1240 = vmatprep.subr.mxu0 %v1108
      %1241 = vmatpush1.msra.mxu0 %v1107
      %1242 = vmatprep.subr.mxu0 %v1112
      %1243 = vmatpush1.msra.mxu0 %v1111
      %1244 = vmatprep.subr.mxu0 %v1116
      %1245 = vmatpush1.msra.mxu0 %v1115
      %1246 = vmatprep.subr.mxu0 %v1120
      %1247 = vmatpush1.msra.mxu0 %v1119
      %1248 = vmatprep.subr.mxu0 %v1124
      %1249 = vmatpush1.msra.mxu0 %v1123
      %1250 = vmatprep.subr.mxu0 %v1128
      %1251 = vmatpush1.msra.mxu0 %v1127
      %1252 = vmatprep.subr.mxu0 %v1132
      %1253 = vmatpush1.msra.mxu0 %v1131
      %1254 = vmatprep.subr.mxu0 %v1136
      %1255 = vmatpush1.msra.mxu0 %v1135
      %1256 = vmatprep.subr.mxu0 %v1140
      %1257 = vmatpush1.msra.mxu0 %v1139
      %1258 = vmatprep.subr.mxu0 %v1144
      %1259 = vmatpush1.msra.mxu0 %v1143
      %1260 = vmatprep.subr.mxu0 %v1148
      %1261 = vmatpush1.msra.mxu0 %v1147
      %1262 = vmatprep.subr.mxu0 %v1152
      %1263 = vmatpush1.msra.mxu0 %v1151
      %1264 = vmatprep.subr.mxu0 %v1156
      %1265 = vmatpush1.msra.mxu0 %v1155
      %1266 = vmatprep.subr.mxu0 %v1160
      %1267 = vmatpush1.msra.mxu0 %v1159
      %1268 = vmatprep.subr.mxu0 %v1164
      %1269 = vmatpush1.msra.mxu0 %v1163
      %1270 = vmatprep.subr.mxu0 %v1168
      %1271 = vmatpush1.msra.mxu0 %v1167
      %1272 = vmatprep.subr.mxu0 0.0
      %1273 = vmatpush1.msra.mxu0 0.0
      %1274 = vmatprep.subr.mxu0 0.0
      %1275 = vmatpush1.msra.mxu0 0.0
      %1276 = vmatprep.subr.mxu0 0.0
      %1277 = vmatpush1.msra.mxu0 0.0
      %1278 = vmatprep.subr.mxu0 0.0
      %1279 = vmatpush1.msra.mxu0 0.0
      %1280 = vmatprep.subr.mxu0 0.0
      %1281 = vmatpush1.msra.mxu0 0.0
      %1282 = vmatprep.subr.mxu0 0.0
      %1283 = vmatpush1.msra.mxu0 0.0
      %1284 = vmatprep.subr.mxu0 0.0
      %1285 = vmatpush1.msra.mxu0 0.0
      %1286 = vmatprep.subr.mxu0 0.0
      %1287 = vmatpush1.msra.mxu0 0.0
      %1288 = vmatprep.subr.mxu0 0.0
      %1289 = vmatpush1.msra.mxu0 0.0
      %1290 = vmatprep.subr.mxu0 0.0
      %1291 = vmatpush1.msra.mxu0 0.0
      %1292 = vmatprep.subr.mxu0 0.0
      %1293 = vmatpush1.msra.mxu0 0.0
      %1294 = vmatprep.subr.mxu0 0.0
      %1295 = vmatpush1.msra.mxu0 0.0
      %1296 = vmatprep.subr.mxu0 0.0
      %1297 = vmatpush1.msra.mxu0 0.0
      %1298 = vmatprep.subr.mxu0 0.0
      %1299 = vmatpush1.msra.mxu0 0.0
      %1300 = vmatprep.subr.mxu0 0.0
      %1301 = vmatpush1.msra.mxu0 0.0
      %1302 = vmatprep.subr.mxu0 0.0
      %1303 = vmatpush1.msra.mxu0 0.0
      %1304 = vmatprep.mubr.f32.mxu0 0.0
      %1305 = vmatmul.mubr.f32.gmra.mrb[0].mxu0 %v1104
      %v1306 = vpop.f32.mrb[0].mxu0
      %v1307 = vadd.f32 0.0, %v1306
      %v1308 = vpop.f32.mrb[0].mxu0
      %v1309 = vadd.f32 0.0, %v1308
      %1310 = vdwg.mxu0
      %1311 = vmatprep.subr.mxu0 %v1041
      %1312 = vmatpush1.msra.mxu0 %v1040
      %1313 = vmatprep.subr.mxu0 %v1045
      %1314 = vmatpush1.msra.mxu0 %v1044
      %1315 = vmatprep.subr.mxu0 %v1049
      %1316 = vmatpush1.msra.mxu0 %v1048
      %1317 = vmatprep.subr.mxu0 %v1053
      %1318 = vmatpush1.msra.mxu0 %v1052
      %1319 = vmatprep.subr.mxu0 %v1057
      %1320 = vmatpush1.msra.mxu0 %v1056
      %1321 = vmatprep.subr.mxu0 %v1061
      %1322 = vmatpush1.msra.mxu0 %v1060
      %1323 = vmatprep.subr.mxu0 %v1065
      %1324 = vmatpush1.msra.mxu0 %v1064
      %1325 = vmatprep.subr.mxu0 %v1069
      %1326 = vmatpush1.msra.mxu0 %v1068
      %1327 = vmatprep.subr.mxu0 %v1073
      %1328 = vmatpush1.msra.mxu0 %v1072
      %1329 = vmatprep.subr.mxu0 %v1077
      %1330 = vmatpush1.msra.mxu0 %v1076
      %1331 = vmatprep.subr.mxu0 %v1081
      %1332 = vmatpush1.msra.mxu0 %v1080
      %1333 = vmatprep.subr.mxu0 %v1085
      %1334 = vmatpush1.msra.mxu0 %v1084
      %1335 = vmatprep.subr.mxu0 %v1089
      %1336 = vmatpush1.msra.mxu0 %v1088
      %1337 = vmatprep.subr.mxu0 %v1093
      %1338 = vmatpush1.msra.mxu0 %v1092
      %1339 = vmatprep.subr.mxu0 %v1097
      %1340 = vmatpush1.msra.mxu0 %v1096
      %1341 = vmatprep.subr.mxu0 %v1101
      %1342 = vmatpush1.msra.mxu0 %v1100
      %1343 = vmatprep.subr.mxu0 0.0
      %1344 = vmatpush1.msra.mxu0 0.0
      %1345 = vmatprep.subr.mxu0 0.0
      %1346 = vmatpush1.msra.mxu0 0.0
      %1347 = vmatprep.subr.mxu0 0.0
      %1348 = vmatpush1.msra.mxu0 0.0
      %1349 = vmatprep.subr.mxu0 0.0
      %1350 = vmatpush1.msra.mxu0 0.0
      %1351 = vmatprep.subr.mxu0 0.0
      %1352 = vmatpush1.msra.mxu0 0.0
      %1353 = vmatprep.subr.mxu0 0.0
      %1354 = vmatpush1.msra.mxu0 0.0
      %1355 = vmatprep.subr.mxu0 0.0
      %1356 = vmatpush1.msra.mxu0 0.0
      %1357 = vmatprep.subr.mxu0 0.0
      %1358 = vmatpush1.msra.mxu0 0.0
      %1359 = vmatprep.subr.mxu0 0.0
      %1360 = vmatpush1.msra.mxu0 0.0
      %1361 = vmatprep.subr.mxu0 0.0
      %1362 = vmatpush1.msra.mxu0 0.0
      %1363 = vmatprep.subr.mxu0 0.0
      %1364 = vmatpush1.msra.mxu0 0.0
      %1365 = vmatprep.subr.mxu0 0.0
      %1366 = vmatpush1.msra.mxu0 0.0
      %1367 = vmatprep.subr.mxu0 0.0
      %1368 = vmatpush1.msra.mxu0 0.0
      %1369 = vmatprep.subr.mxu0 0.0
      %1370 = vmatpush1.msra.mxu0 0.0
      %1371 = vmatprep.subr.mxu0 0.0
      %1372 = vmatpush1.msra.mxu0 0.0
      %1373 = vmatprep.subr.mxu0 0.0
      %1374 = vmatpush1.msra.mxu0 0.0
      %1375 = vmatprep.mubr.f32.mxu0 0.0
      %1376 = vmatmul.mubr.f32.gmra.mrb[0].mxu0 %v1039
      %v1377 = vpop.f32.mrb[0].mxu0
      %v1378 = vadd.f32 %v1236, %v1377
      %v1379 = vpop.f32.mrb[0].mxu0
      %v1380 = vadd.f32 %v1238, %v1379
      %1381 = vdwg.mxu0
      %1382 = vmatprep.subr.mxu0 %v1043
      %1383 = vmatpush1.msra.mxu0 %v1042
      %1384 = vmatprep.subr.mxu0 %v1047
      %1385 = vmatpush1.msra.mxu0 %v1046
      %1386 = vmatprep.subr.mxu0 %v1051
      %1387 = vmatpush1.msra.mxu0 %v1050
      %1388 = vmatprep.subr.mxu0 %v1055
      %1389 = vmatpush1.msra.mxu0 %v1054
      %1390 = vmatprep.subr.mxu0 %v1059
      %1391 = vmatpush1.msra.mxu0 %v1058
      %1392 = vmatprep.subr.mxu0 %v1063
      %1393 = vmatpush1.msra.mxu0 %v1062
      %1394 = vmatprep.subr.mxu0 %v1067
      %1395 = vmatpush1.msra.mxu0 %v1066
      %1396 = vmatprep.subr.mxu0 %v1071
      %1397 = vmatpush1.msra.mxu0 %v1070
      %1398 = vmatprep.subr.mxu0 %v1075
      %1399 = vmatpush1.msra.mxu0 %v1074
      %1400 = vmatprep.subr.mxu0 %v1079
      %1401 = vmatpush1.msra.mxu0 %v1078
      %1402 = vmatprep.subr.mxu0 %v1083
      %1403 = vmatpush1.msra.mxu0 %v1082
      %1404 = vmatprep.subr.mxu0 %v1087
      %1405 = vmatpush1.msra.mxu0 %v1086
      %1406 = vmatprep.subr.mxu0 %v1091
      %1407 = vmatpush1.msra.mxu0 %v1090
      %1408 = vmatprep.subr.mxu0 %v1095
      %1409 = vmatpush1.msra.mxu0 %v1094
      %1410 = vmatprep.subr.mxu0 %v1099
      %1411 = vmatpush1.msra.mxu0 %v1098
      %1412 = vmatprep.subr.mxu0 %v1103
      %1413 = vmatpush1.msra.mxu0 %v1102
      %1414 = vmatprep.subr.mxu0 0.0
      %1415 = vmatpush1.msra.mxu0 0.0
      %1416 = vmatprep.subr.mxu0 0.0
      %1417 = vmatpush1.msra.mxu0 0.0
      %1418 = vmatprep.subr.mxu0 0.0
      %1419 = vmatpush1.msra.mxu0 0.0
      %1420 = vmatprep.subr.mxu0 0.0
      %1421 = vmatpush1.msra.mxu0 0.0
      %1422 = vmatprep.subr.mxu0 0.0
      %1423 = vmatpush1.msra.mxu0 0.0
      %1424 = vmatprep.subr.mxu0 0.0
      %1425 = vmatpush1.msra.mxu0 0.0
      %1426 = vmatprep.subr.mxu0 0.0
      %1427 = vmatpush1.msra.mxu0 0.0
      %1428 = vmatprep.subr.mxu0 0.0
      %1429 = vmatpush1.msra.mxu0 0.0
      %1430 = vmatprep.subr.mxu0 0.0
      %1431 = vmatpush1.msra.mxu0 0.0
      %1432 = vmatprep.subr.mxu0 0.0
      %1433 = vmatpush1.msra.mxu0 0.0
      %1434 = vmatprep.subr.mxu0 0.0
      %1435 = vmatpush1.msra.mxu0 0.0
      %1436 = vmatprep.subr.mxu0 0.0
      %1437 = vmatpush1.msra.mxu0 0.0
      %1438 = vmatprep.subr.mxu0 0.0
      %1439 = vmatpush1.msra.mxu0 0.0
      %1440 = vmatprep.subr.mxu0 0.0
      %1441 = vmatpush1.msra.mxu0 0.0
      %1442 = vmatprep.subr.mxu0 0.0
      %1443 = vmatpush1.msra.mxu0 0.0
      %1444 = vmatprep.subr.mxu0 0.0
      %1445 = vmatpush1.msra.mxu0 0.0
      %1446 = vmatprep.mubr.f32.mxu0 0.0
      %1447 = vmatmul.mubr.f32.gmra.mrb[0].mxu0 %v1039
      %v1448 = vpop.f32.mrb[0].mxu0
      %v1449 = vadd.f32 %v1307, %v1448
      %v1450 = vpop.f32.mrb[0].mxu0
      %v1451 = vadd.f32 %v1309, %v1450
      %1452 = vdwg.mxu0
      %v1453 = vld [vmem:[%s3] sm:$0xf]
      %v1455 = vlaneseq
      %v1456 = vshrl.u32 %v1455, 7
      %v1457 = vsub.s32 0, %v1456
      %v1458 = vrot.slane %v1453, %v1457
      %v1459 = vlaneseq
      %v1460 = vshrl.u32 %v1459, 7
      %v1461 = vsub.s32 1, %v1460
      %v1462 = vrot.slane %v1453, %v1461
      %v1463 = vlaneseq
      %v1464 = vshrl.u32 %v1463, 7
      %v1465 = vsub.s32 2, %v1464
      %v1466 = vrot.slane %v1453, %v1465
      %v1467 = vlaneseq
      %v1468 = vshrl.u32 %v1467, 7
      %v1469 = vsub.s32 3, %v1468
      %v1470 = vrot.slane %v1453, %v1469
      %v1475 = vadd.f32 %v1378, %v1458
      %v1476 = vadd.f32 %v1380, %v1462
      %v1477 = vadd.f32 %v1449, %v1466
      %v1478 = vadd.f32 %v1451, %v1470
      %v1479 = vxor.u32 %v1475, 2147483648
      %v1480 = vmul.f32 %v1479, 1.442695
      %v1481 = vpow.pop %v1480
      %v1482 = vadd.f32 %v1481, 1.0
      %v1483 = vrcp.pop %v1482
      %v1484 = vmul.f32 1.0, %v1483
      %v1485 = vxor.u32 %v1476, 2147483648
      %v1486 = vmul.f32 %v1485, 1.442695
      %v1487 = vpow.pop %v1486
      %v1488 = vadd.f32 %v1487, 1.0
      %v1489 = vrcp.pop %v1488
      %v1490 = vmul.f32 1.0, %v1489
      %v1491 = vtanh.pop %v1477
      %v1492 = vxor.u32 %v1478, 2147483648
      %v1493 = vmul.f32 %v1492, 1.442695
      %v1494 = vpow.pop %v1493
      %v1495 = vadd.f32 %v1494, 1.0
      %v1496 = vrcp.pop %v1495
      %v1497 = vmul.f32 1.0, %v1496
      %v1498 = vld [vmem:[#allocation11] sm:$0x3]
      %v1499 = vmul.f32 %v1490, %v1498
      %v1500 = vmul.f32 %v1484, %v1491
      %v1501 = vadd.f32 %v1499, %v1500
      %1502 = vst [vmem:[#allocation11] sm:$0x3] %v1501
      %v1503 = vtanh.pop %v1501
      %v1504 = vmul.f32 %v1497, %v1503
      %1505 = vst [vmem:[#allocation9] sm:$0x3] %v1504
    $region53: #{tpu_custom_call.1} parent=1 // pred_fallthru
      _
    %v1506 = vld [vmem:[#allocation9] sm:$0x3]
    %v1507 = vpack.c.bf16 %v1506, %v1506
    %v1509 = vunpack.c.l.b16 %v1507
    %v1510 = vpack.c.b16 %v1509, %v1509
    %v1511 = vrot.slane %v1510, 6
    %1513 = vst [vmem:[#allocation8] sm:$0x4] %v1511
    %s1514 = sadd.s32 %s77, 3
    %p1515 = scmp.lt.s32.totalorder %s1514, 1
    // Predicated region
    $region54: #{tpu_custom_call.1} parent=1 // pred_check
      %p1516 = pneg %p1515
    $region55: #{tpu_custom_call.1} parent=1 // pred_check_branch
      %1518 = sbr.rel (%p1516) target = $region57
    $region56: #{tpu_custom_call.1} parent=1 // pred_region
      %s1519 = scalar_lea.vmem [#allocation2], 6
      %v1520 = vld [vmem:[%s1519] sm:$0x3]
      %v1521 = vld [vmem:[#allocation5] sm:$0xff]
      %v1522 = vld [vmem:[#allocation5 + $0x8] sm:$0xff]
      %v1523 = vld [vmem:[#allocation5 + $0x10] sm:$0xff]
      %v1524 = vld [vmem:[#allocation5 + $0x18] sm:$0xff]
      %v1525 = vld [vmem:[#allocation5 + $0x20] sm:$0xff]
      %v1526 = vld [vmem:[#allocation5 + $0x28] sm:$0xff]
      %v1527 = vld [vmem:[#allocation5 + $0x30] sm:$0xff]
      %v1528 = vld [vmem:[#allocation5 + $0x38] sm:$0xff]
      %v1529 = vld [vmem:[#allocation5 + $0x40] sm:$0xff]
      %v1530 = vld [vmem:[#allocation5 + $0x48] sm:$0xff]
      %v1531 = vld [vmem:[#allocation5 + $0x50] sm:$0xff]
      %v1532 = vld [vmem:[#allocation5 + $0x58] sm:$0xff]
      %v1533 = vld [vmem:[#allocation5 + $0x60] sm:$0xff]
      %v1534 = vld [vmem:[#allocation5 + $0x68] sm:$0xff]
      %v1535 = vld [vmem:[#allocation5 + $0x70] sm:$0xff]
      %v1536 = vld [vmem:[#allocation5 + $0x78] sm:$0xff]
      %v1537 = vld [vmem:[#allocation5 + $0x80] sm:$0xff]
      %v1538 = vld [vmem:[#allocation5 + $0x88] sm:$0xff]
      %v1539 = vld [vmem:[#allocation5 + $0x90] sm:$0xff]
      %v1540 = vld [vmem:[#allocation5 + $0x98] sm:$0xff]
      %v1541 = vld [vmem:[#allocation5 + $0xa0] sm:$0xff]
      %v1542 = vld [vmem:[#allocation5 + $0xa8] sm:$0xff]
      %v1543 = vld [vmem:[#allocation5 + $0xb0] sm:$0xff]
      %v1544 = vld [vmem:[#allocation5 + $0xb8] sm:$0xff]
      %v1545 = vld [vmem:[#allocation5 + $0xc0] sm:$0xff]
      %v1546 = vld [vmem:[#allocation5 + $0xc8] sm:$0xff]
      %v1547 = vld [vmem:[#allocation5 + $0xd0] sm:$0xff]
      %v1548 = vld [vmem:[#allocation5 + $0xd8] sm:$0xff]
      %v1549 = vld [vmem:[#allocation5 + $0xe0] sm:$0xff]
      %v1550 = vld [vmem:[#allocation5 + $0xe8] sm:$0xff]
      %v1551 = vld [vmem:[#allocation5 + $0xf0] sm:$0xff]
      %v1552 = vld [vmem:[#allocation5 + $0xf8] sm:$0xff]
      %v1553 = vld [vmem:[#allocation5 + $0x100] sm:$0xff]
      %v1554 = vld [vmem:[#allocation5 + $0x108] sm:$0xff]
      %v1555 = vld [vmem:[#allocation5 + $0x110] sm:$0xff]
      %v1556 = vld [vmem:[#allocation5 + $0x118] sm:$0xff]
      %v1557 = vld [vmem:[#allocation5 + $0x120] sm:$0xff]
      %v1558 = vld [vmem:[#allocation5 + $0x128] sm:$0xff]
      %v1559 = vld [vmem:[#allocation5 + $0x130] sm:$0xff]
      %v1560 = vld [vmem:[#allocation5 + $0x138] sm:$0xff]
      %v1561 = vld [vmem:[#allocation5 + $0x140] sm:$0xff]
      %v1562 = vld [vmem:[#allocation5 + $0x148] sm:$0xff]
      %v1563 = vld [vmem:[#allocation5 + $0x150] sm:$0xff]
      %v1564 = vld [vmem:[#allocation5 + $0x158] sm:$0xff]
      %v1565 = vld [vmem:[#allocation5 + $0x160] sm:$0xff]
      %v1566 = vld [vmem:[#allocation5 + $0x168] sm:$0xff]
      %v1567 = vld [vmem:[#allocation5 + $0x170] sm:$0xff]
      %v1568 = vld [vmem:[#allocation5 + $0x178] sm:$0xff]
      %v1569 = vld [vmem:[#allocation5 + $0x180] sm:$0xff]
      %v1570 = vld [vmem:[#allocation5 + $0x188] sm:$0xff]
      %v1571 = vld [vmem:[#allocation5 + $0x190] sm:$0xff]
      %v1572 = vld [vmem:[#allocation5 + $0x198] sm:$0xff]
      %v1573 = vld [vmem:[#allocation5 + $0x1a0] sm:$0xff]
      %v1574 = vld [vmem:[#allocation5 + $0x1a8] sm:$0xff]
      %v1575 = vld [vmem:[#allocation5 + $0x1b0] sm:$0xff]
      %v1576 = vld [vmem:[#allocation5 + $0x1b8] sm:$0xff]
      %v1577 = vld [vmem:[#allocation5 + $0x1c0] sm:$0xff]
      %v1578 = vld [vmem:[#allocation5 + $0x1c8] sm:$0xff]
      %v1579 = vld [vmem:[#allocation5 + $0x1d0] sm:$0xff]
      %v1580 = vld [vmem:[#allocation5 + $0x1d8] sm:$0xff]
      %v1581 = vld [vmem:[#allocation5 + $0x1e0] sm:$0xff]
      %v1582 = vld [vmem:[#allocation5 + $0x1e8] sm:$0xff]
      %v1583 = vld [vmem:[#allocation5 + $0x1f0] sm:$0xff]
      %v1584 = vld [vmem:[#allocation5 + $0x1f8] sm:$0xff]
      %v1585 = vld [vmem:[#allocation9] sm:$0x3]
      %v1586 = vld [vmem:[#allocation7] sm:$0xff]
      %v1587 = vld [vmem:[#allocation7 + $0x8] sm:$0xff]
      %v1588 = vld [vmem:[#allocation7 + $0x10] sm:$0xff]
      %v1589 = vld [vmem:[#allocation7 + $0x18] sm:$0xff]
      %v1590 = vld [vmem:[#allocation7 + $0x20] sm:$0xff]
      %v1591 = vld [vmem:[#allocation7 + $0x28] sm:$0xff]
      %v1592 = vld [vmem:[#allocation7 + $0x30] sm:$0xff]
      %v1593 = vld [vmem:[#allocation7 + $0x38] sm:$0xff]
      %v1594 = vld [vmem:[#allocation7 + $0x40] sm:$0xff]
      %v1595 = vld [vmem:[#allocation7 + $0x48] sm:$0xff]
      %v1596 = vld [vmem:[#allocation7 + $0x50] sm:$0xff]
      %v1597 = vld [vmem:[#allocation7 + $0x58] sm:$0xff]
      %v1598 = vld [vmem:[#allocation7 + $0x60] sm:$0xff]
      %v1599 = vld [vmem:[#allocation7 + $0x68] sm:$0xff]
      %v1600 = vld [vmem:[#allocation7 + $0x70] sm:$0xff]
      %v1601 = vld [vmem:[#allocation7 + $0x78] sm:$0xff]
      %v1602 = vld [vmem:[#allocation7 + $0x80] sm:$0xff]
      %v1603 = vld [vmem:[#allocation7 + $0x88] sm:$0xff]
      %v1604 = vld [vmem:[#allocation7 + $0x90] sm:$0xff]
      %v1605 = vld [vmem:[#allocation7 + $0x98] sm:$0xff]
      %v1606 = vld [vmem:[#allocation7 + $0xa0] sm:$0xff]
      %v1607 = vld [vmem:[#allocation7 + $0xa8] sm:$0xff]
      %v1608 = vld [vmem:[#allocation7 + $0xb0] sm:$0xff]
      %v1609 = vld [vmem:[#allocation7 + $0xb8] sm:$0xff]
      %v1610 = vld [vmem:[#allocation7 + $0xc0] sm:$0xff]
      %v1611 = vld [vmem:[#allocation7 + $0xc8] sm:$0xff]
      %v1612 = vld [vmem:[#allocation7 + $0xd0] sm:$0xff]
      %v1613 = vld [vmem:[#allocation7 + $0xd8] sm:$0xff]
      %v1614 = vld [vmem:[#allocation7 + $0xe0] sm:$0xff]
      %v1615 = vld [vmem:[#allocation7 + $0xe8] sm:$0xff]
      %v1616 = vld [vmem:[#allocation7 + $0xf0] sm:$0xff]
      %v1617 = vld [vmem:[#allocation7 + $0xf8] sm:$0xff]
      %v1618 = vld [vmem:[#allocation7 + $0x100] sm:$0xff]
      %v1619 = vld [vmem:[#allocation7 + $0x108] sm:$0xff]
      %v1620 = vld [vmem:[#allocation7 + $0x110] sm:$0xff]
      %v1621 = vld [vmem:[#allocation7 + $0x118] sm:$0xff]
      %v1622 = vld [vmem:[#allocation7 + $0x120] sm:$0xff]
      %v1623 = vld [vmem:[#allocation7 + $0x128] sm:$0xff]
      %v1624 = vld [vmem:[#allocation7 + $0x130] sm:$0xff]
      %v1625 = vld [vmem:[#allocation7 + $0x138] sm:$0xff]
      %v1626 = vld [vmem:[#allocation7 + $0x140] sm:$0xff]
      %v1627 = vld [vmem:[#allocation7 + $0x148] sm:$0xff]
      %v1628 = vld [vmem:[#allocation7 + $0x150] sm:$0xff]
      %v1629 = vld [vmem:[#allocation7 + $0x158] sm:$0xff]
      %v1630 = vld [vmem:[#allocation7 + $0x160] sm:$0xff]
      %v1631 = vld [vmem:[#allocation7 + $0x168] sm:$0xff]
      %v1632 = vld [vmem:[#allocation7 + $0x170] sm:$0xff]
      %v1633 = vld [vmem:[#allocation7 + $0x178] sm:$0xff]
      %v1634 = vld [vmem:[#allocation7 + $0x180] sm:$0xff]
      %v1635 = vld [vmem:[#allocation7 + $0x188] sm:$0xff]
      %v1636 = vld [vmem:[#allocation7 + $0x190] sm:$0xff]
      %v1637 = vld [vmem:[#allocation7 + $0x198] sm:$0xff]
      %v1638 = vld [vmem:[#allocation7 + $0x1a0] sm:$0xff]
      %v1639 = vld [vmem:[#allocation7 + $0x1a8] sm:$0xff]
      %v1640 = vld [vmem:[#allocation7 + $0x1b0] sm:$0xff]
      %v1641 = vld [vmem:[#allocation7 + $0x1b8] sm:$0xff]
      %v1642 = vld [vmem:[#allocation7 + $0x1c0] sm:$0xff]
      %v1643 = vld [vmem:[#allocation7 + $0x1c8] sm:$0xff]
      %v1644 = vld [vmem:[#allocation7 + $0x1d0] sm:$0xff]
      %v1645 = vld [vmem:[#allocation7 + $0x1d8] sm:$0xff]
      %v1646 = vld [vmem:[#allocation7 + $0x1e0] sm:$0xff]
      %v1647 = vld [vmem:[#allocation7 + $0x1e8] sm:$0xff]
      %v1648 = vld [vmem:[#allocation7 + $0x1f0] sm:$0xff]
      %v1649 = vld [vmem:[#allocation7 + $0x1f8] sm:$0xff]
      %1650 = vmatprep.subr.mxu0 %v1587
      %1651 = vmatpush1.msra.mxu0 %v1586
      %1652 = vmatprep.subr.mxu0 %v1591
      %1653 = vmatpush1.msra.mxu0 %v1590
      %1654 = vmatprep.subr.mxu0 %v1595
      %1655 = vmatpush1.msra.mxu0 %v1594
      %1656 = vmatprep.subr.mxu0 %v1599
      %1657 = vmatpush1.msra.mxu0 %v1598
      %1658 = vmatprep.subr.mxu0 %v1603
      %1659 = vmatpush1.msra.mxu0 %v1602
      %1660 = vmatprep.subr.mxu0 %v1607
      %1661 = vmatpush1.msra.mxu0 %v1606
      %1662 = vmatprep.subr.mxu0 %v1611
      %1663 = vmatpush1.msra.mxu0 %v1610
      %1664 = vmatprep.subr.mxu0 %v1615
      %1665 = vmatpush1.msra.mxu0 %v1614
      %1666 = vmatprep.subr.mxu0 %v1619
      %1667 = vmatpush1.msra.mxu0 %v1618
      %1668 = vmatprep.subr.mxu0 %v1623
      %1669 = vmatpush1.msra.mxu0 %v1622
      %1670 = vmatprep.subr.mxu0 %v1627
      %1671 = vmatpush1.msra.mxu0 %v1626
      %1672 = vmatprep.subr.mxu0 %v1631
      %1673 = vmatpush1.msra.mxu0 %v1630
      %1674 = vmatprep.subr.mxu0 %v1635
      %1675 = vmatpush1.msra.mxu0 %v1634
      %1676 = vmatprep.subr.mxu0 %v1639
      %1677 = vmatpush1.msra.mxu0 %v1638
      %1678 = vmatprep.subr.mxu0 %v1643
      %1679 = vmatpush1.msra.mxu0 %v1642
      %1680 = vmatprep.subr.mxu0 %v1647
      %1681 = vmatpush1.msra.mxu0 %v1646
      %1682 = vmatprep.subr.mxu0 0.0
      %1683 = vmatpush1.msra.mxu0 0.0
      %1684 = vmatprep.subr.mxu0 0.0
      %1685 = vmatpush1.msra.mxu0 0.0
      %1686 = vmatprep.subr.mxu0 0.0
      %1687 = vmatpush1.msra.mxu0 0.0
      %1688 = vmatprep.subr.mxu0 0.0
      %1689 = vmatpush1.msra.mxu0 0.0
      %1690 = vmatprep.subr.mxu0 0.0
      %1691 = vmatpush1.msra.mxu0 0.0
      %1692 = vmatprep.subr.mxu0 0.0
      %1693 = vmatpush1.msra.mxu0 0.0
      %1694 = vmatprep.subr.mxu0 0.0
      %1695 = vmatpush1.msra.mxu0 0.0
      %1696 = vmatprep.subr.mxu0 0.0
      %1697 = vmatpush1.msra.mxu0 0.0
      %1698 = vmatprep.subr.mxu0 0.0
      %1699 = vmatpush1.msra.mxu0 0.0
      %1700 = vmatprep.subr.mxu0 0.0
      %1701 = vmatpush1.msra.mxu0 0.0
      %1702 = vmatprep.subr.mxu0 0.0
      %1703 = vmatpush1.msra.mxu0 0.0
      %1704 = vmatprep.subr.mxu0 0.0
      %1705 = vmatpush1.msra.mxu0 0.0
      %1706 = vmatprep.subr.mxu0 0.0
      %1707 = vmatpush1.msra.mxu0 0.0
      %1708 = vmatprep.subr.mxu0 0.0
      %1709 = vmatpush1.msra.mxu0 0.0
      %1710 = vmatprep.subr.mxu0 0.0
      %1711 = vmatpush1.msra.mxu0 0.0
      %1712 = vmatprep.subr.mxu0 0.0
      %1713 = vmatpush1.msra.mxu0 0.0
      %1714 = vmatprep.mubr.f32.mxu0 0.0
      %1715 = vmatmul.mubr.f32.gmra.mrb[0].mxu0 %v1585
      %v1716 = vpop.f32.mrb[0].mxu0
      %v1717 = vadd.f32 0.0, %v1716
      %v1718 = vpop.f32.mrb[0].mxu0
      %v1719 = vadd.f32 0.0, %v1718
      %1720 = vdwg.mxu0
      %1721 = vmatprep.subr.mxu0 %v1589
      %1722 = vmatpush1.msra.mxu0 %v1588
      %1723 = vmatprep.subr.mxu0 %v1593
      %1724 = vmatpush1.msra.mxu0 %v1592
      %1725 = vmatprep.subr.mxu0 %v1597
      %1726 = vmatpush1.msra.mxu0 %v1596
      %1727 = vmatprep.subr.mxu0 %v1601
      %1728 = vmatpush1.msra.mxu0 %v1600
      %1729 = vmatprep.subr.mxu0 %v1605
      %1730 = vmatpush1.msra.mxu0 %v1604
      %1731 = vmatprep.subr.mxu0 %v1609
      %1732 = vmatpush1.msra.mxu0 %v1608
      %1733 = vmatprep.subr.mxu0 %v1613
      %1734 = vmatpush1.msra.mxu0 %v1612
      %1735 = vmatprep.subr.mxu0 %v1617
      %1736 = vmatpush1.msra.mxu0 %v1616
      %1737 = vmatprep.subr.mxu0 %v1621
      %1738 = vmatpush1.msra.mxu0 %v1620
      %1739 = vmatprep.subr.mxu0 %v1625
      %1740 = vmatpush1.msra.mxu0 %v1624
      %1741 = vmatprep.subr.mxu0 %v1629
      %1742 = vmatpush1.msra.mxu0 %v1628
      %1743 = vmatprep.subr.mxu0 %v1633
      %1744 = vmatpush1.msra.mxu0 %v1632
      %1745 = vmatprep.subr.mxu0 %v1637
      %1746 = vmatpush1.msra.mxu0 %v1636
      %1747 = vmatprep.subr.mxu0 %v1641
      %1748 = vmatpush1.msra.mxu0 %v1640
      %1749 = vmatprep.subr.mxu0 %v1645
      %1750 = vmatpush1.msra.mxu0 %v1644
      %1751 = vmatprep.subr.mxu0 %v1649
      %1752 = vmatpush1.msra.mxu0 %v1648
      %1753 = vmatprep.subr.mxu0 0.0
      %1754 = vmatpush1.msra.mxu0 0.0
      %1755 = vmatprep.subr.mxu0 0.0
      %1756 = vmatpush1.msra.mxu0 0.0
      %1757 = vmatprep.subr.mxu0 0.0
      %1758 = vmatpush1.msra.mxu0 0.0
      %1759 = vmatprep.subr.mxu0 0.0
      %1760 = vmatpush1.msra.mxu0 0.0
      %1761 = vmatprep.subr.mxu0 0.0
      %1762 = vmatpush1.msra.mxu0 0.0
      %1763 = vmatprep.subr.mxu0 0.0
      %1764 = vmatpush1.msra.mxu0 0.0
      %1765 = vmatprep.subr.mxu0 0.0
      %1766 = vmatpush1.msra.mxu0 0.0
      %1767 = vmatprep.subr.mxu0 0.0
      %1768 = vmatpush1.msra.mxu0 0.0
      %1769 = vmatprep.subr.mxu0 0.0
      %1770 = vmatpush1.msra.mxu0 0.0
      %1771 = vmatprep.subr.mxu0 0.0
      %1772 = vmatpush1.msra.mxu0 0.0
      %1773 = vmatprep.subr.mxu0 0.0
      %1774 = vmatpush1.msra.mxu0 0.0
      %1775 = vmatprep.subr.mxu0 0.0
      %1776 = vmatpush1.msra.mxu0 0.0
      %1777 = vmatprep.subr.mxu0 0.0
      %1778 = vmatpush1.msra.mxu0 0.0
      %1779 = vmatprep.subr.mxu0 0.0
      %1780 = vmatpush1.msra.mxu0 0.0
      %1781 = vmatprep.subr.mxu0 0.0
      %1782 = vmatpush1.msra.mxu0 0.0
      %1783 = vmatprep.subr.mxu0 0.0
      %1784 = vmatpush1.msra.mxu0 0.0
      %1785 = vmatprep.mubr.f32.mxu0 0.0
      %1786 = vmatmul.mubr.f32.gmra.mrb[0].mxu0 %v1585
      %v1787 = vpop.f32.mrb[0].mxu0
      %v1788 = vadd.f32 0.0, %v1787
      %v1789 = vpop.f32.mrb[0].mxu0
      %v1790 = vadd.f32 0.0, %v1789
      %1791 = vdwg.mxu0
      %1792 = vmatprep.subr.mxu0 %v1522
      %1793 = vmatpush1.msra.mxu0 %v1521
      %1794 = vmatprep.subr.mxu0 %v1526
      %1795 = vmatpush1.msra.mxu0 %v1525
      %1796 = vmatprep.subr.mxu0 %v1530
      %1797 = vmatpush1.msra.mxu0 %v1529
      %1798 = vmatprep.subr.mxu0 %v1534
      %1799 = vmatpush1.msra.mxu0 %v1533
      %1800 = vmatprep.subr.mxu0 %v1538
      %1801 = vmatpush1.msra.mxu0 %v1537
      %1802 = vmatprep.subr.mxu0 %v1542
      %1803 = vmatpush1.msra.mxu0 %v1541
      %1804 = vmatprep.subr.mxu0 %v1546
      %1805 = vmatpush1.msra.mxu0 %v1545
      %1806 = vmatprep.subr.mxu0 %v1550
      %1807 = vmatpush1.msra.mxu0 %v1549
      %1808 = vmatprep.subr.mxu0 %v1554
      %1809 = vmatpush1.msra.mxu0 %v1553
      %1810 = vmatprep.subr.mxu0 %v1558
      %1811 = vmatpush1.msra.mxu0 %v1557
      %1812 = vmatprep.subr.mxu0 %v1562
      %1813 = vmatpush1.msra.mxu0 %v1561
      %1814 = vmatprep.subr.mxu0 %v1566
      %1815 = vmatpush1.msra.mxu0 %v1565
      %1816 = vmatprep.subr.mxu0 %v1570
      %1817 = vmatpush1.msra.mxu0 %v1569
      %1818 = vmatprep.subr.mxu0 %v1574
      %1819 = vmatpush1.msra.mxu0 %v1573
      %1820 = vmatprep.subr.mxu0 %v1578
      %1821 = vmatpush1.msra.mxu0 %v1577
      %1822 = vmatprep.subr.mxu0 %v1582
      %1823 = vmatpush1.msra.mxu0 %v1581
      %1824 = vmatprep.subr.mxu0 0.0
      %1825 = vmatpush1.msra.mxu0 0.0
      %1826 = vmatprep.subr.mxu0 0.0
      %1827 = vmatpush1.msra.mxu0 0.0
      %1828 = vmatprep.subr.mxu0 0.0
      %1829 = vmatpush1.msra.mxu0 0.0
      %1830 = vmatprep.subr.mxu0 0.0
      %1831 = vmatpush1.msra.mxu0 0.0
      %1832 = vmatprep.subr.mxu0 0.0
      %1833 = vmatpush1.msra.mxu0 0.0
      %1834 = vmatprep.subr.mxu0 0.0
      %1835 = vmatpush1.msra.mxu0 0.0
      %1836 = vmatprep.subr.mxu0 0.0
      %1837 = vmatpush1.msra.mxu0 0.0
      %1838 = vmatprep.subr.mxu0 0.0
      %1839 = vmatpush1.msra.mxu0 0.0
      %1840 = vmatprep.subr.mxu0 0.0
      %1841 = vmatpush1.msra.mxu0 0.0
      %1842 = vmatprep.subr.mxu0 0.0
      %1843 = vmatpush1.msra.mxu0 0.0
      %1844 = vmatprep.subr.mxu0 0.0
      %1845 = vmatpush1.msra.mxu0 0.0
      %1846 = vmatprep.subr.mxu0 0.0
      %1847 = vmatpush1.msra.mxu0 0.0
      %1848 = vmatprep.subr.mxu0 0.0
      %1849 = vmatpush1.msra.mxu0 0.0
      %1850 = vmatprep.subr.mxu0 0.0
      %1851 = vmatpush1.msra.mxu0 0.0
      %1852 = vmatprep.subr.mxu0 0.0
      %1853 = vmatpush1.msra.mxu0 0.0
      %1854 = vmatprep.subr.mxu0 0.0
      %1855 = vmatpush1.msra.mxu0 0.0
      %1856 = vmatprep.mubr.f32.mxu0 0.0
      %1857 = vmatmul.mubr.f32.gmra.mrb[0].mxu0 %v1520
      %v1858 = vpop.f32.mrb[0].mxu0
      %v1859 = vadd.f32 %v1717, %v1858
      %v1860 = vpop.f32.mrb[0].mxu0
      %v1861 = vadd.f32 %v1719, %v1860
      %1862 = vdwg.mxu0
      %1863 = vmatprep.subr.mxu0 %v1524
      %1864 = vmatpush1.msra.mxu0 %v1523
      %1865 = vmatprep.subr.mxu0 %v1528
      %1866 = vmatpush1.msra.mxu0 %v1527
      %1867 = vmatprep.subr.mxu0 %v1532
      %1868 = vmatpush1.msra.mxu0 %v1531
      %1869 = vmatprep.subr.mxu0 %v1536
      %1870 = vmatpush1.msra.mxu0 %v1535
      %1871 = vmatprep.subr.mxu0 %v1540
      %1872 = vmatpush1.msra.mxu0 %v1539
      %1873 = vmatprep.subr.mxu0 %v1544
      %1874 = vmatpush1.msra.mxu0 %v1543
      %1875 = vmatprep.subr.mxu0 %v1548
      %1876 = vmatpush1.msra.mxu0 %v1547
      %1877 = vmatprep.subr.mxu0 %v1552
      %1878 = vmatpush1.msra.mxu0 %v1551
      %1879 = vmatprep.subr.mxu0 %v1556
      %1880 = vmatpush1.msra.mxu0 %v1555
      %1881 = vmatprep.subr.mxu0 %v1560
      %1882 = vmatpush1.msra.mxu0 %v1559
      %1883 = vmatprep.subr.mxu0 %v1564
      %1884 = vmatpush1.msra.mxu0 %v1563
      %1885 = vmatprep.subr.mxu0 %v1568
      %1886 = vmatpush1.msra.mxu0 %v1567
      %1887 = vmatprep.subr.mxu0 %v1572
      %1888 = vmatpush1.msra.mxu0 %v1571
      %1889 = vmatprep.subr.mxu0 %v1576
      %1890 = vmatpush1.msra.mxu0 %v1575
      %1891 = vmatprep.subr.mxu0 %v1580
      %1892 = vmatpush1.msra.mxu0 %v1579
      %1893 = vmatprep.subr.mxu0 %v1584
      %1894 = vmatpush1.msra.mxu0 %v1583
      %1895 = vmatprep.subr.mxu0 0.0
      %1896 = vmatpush1.msra.mxu0 0.0
      %1897 = vmatprep.subr.mxu0 0.0
      %1898 = vmatpush1.msra.mxu0 0.0
      %1899 = vmatprep.subr.mxu0 0.0
      %1900 = vmatpush1.msra.mxu0 0.0
      %1901 = vmatprep.subr.mxu0 0.0
      %1902 = vmatpush1.msra.mxu0 0.0
      %1903 = vmatprep.subr.mxu0 0.0
      %1904 = vmatpush1.msra.mxu0 0.0
      %1905 = vmatprep.subr.mxu0 0.0
      %1906 = vmatpush1.msra.mxu0 0.0
      %1907 = vmatprep.subr.mxu0 0.0
      %1908 = vmatpush1.msra.mxu0 0.0
      %1909 = vmatprep.subr.mxu0 0.0
      %1910 = vmatpush1.msra.mxu0 0.0
      %1911 = vmatprep.subr.mxu0 0.0
      %1912 = vmatpush1.msra.mxu0 0.0
      %1913 = vmatprep.subr.mxu0 0.0
      %1914 = vmatpush1.msra.mxu0 0.0
      %1915 = vmatprep.subr.mxu0 0.0
      %1916 = vmatpush1.msra.mxu0 0.0
      %1917 = vmatprep.subr.mxu0 0.0
      %1918 = vmatpush1.msra.mxu0 0.0
      %1919 = vmatprep.subr.mxu0 0.0
      %1920 = vmatpush1.msra.mxu0 0.0
      %1921 = vmatprep.subr.mxu0 0.0
      %1922 = vmatpush1.msra.mxu0 0.0
      %1923 = vmatprep.subr.mxu0 0.0
      %1924 = vmatpush1.msra.mxu0 0.0
      %1925 = vmatprep.subr.mxu0 0.0
      %1926 = vmatpush1.msra.mxu0 0.0
      %1927 = vmatprep.mubr.f32.mxu0 0.0
      %1928 = vmatmul.mubr.f32.gmra.mrb[0].mxu0 %v1520
      %v1929 = vpop.f32.mrb[0].mxu0
      %v1930 = vadd.f32 %v1788, %v1929
      %v1931 = vpop.f32.mrb[0].mxu0
      %v1932 = vadd.f32 %v1790, %v1931
      %1933 = vdwg.mxu0
      %v1934 = vld [vmem:[%s3] sm:$0xf]
      %v1936 = vlaneseq
      %v1937 = vshrl.u32 %v1936, 7
      %v1938 = vsub.s32 0, %v1937
      %v1939 = vrot.slane %v1934, %v1938
      %v1940 = vlaneseq
      %v1941 = vshrl.u32 %v1940, 7
      %v1942 = vsub.s32 1, %v1941
      %v1943 = vrot.slane %v1934, %v1942
      %v1944 = vlaneseq
      %v1945 = vshrl.u32 %v1944, 7
      %v1946 = vsub.s32 2, %v1945
      %v1947 = vrot.slane %v1934, %v1946
      %v1948 = vlaneseq
      %v1949 = vshrl.u32 %v1948, 7
      %v1950 = vsub.s32 3, %v1949
      %v1951 = vrot.slane %v1934, %v1950
      %v1956 = vadd.f32 %v1859, %v1939
      %v1957 = vadd.f32 %v1861, %v1943
      %v1958 = vadd.f32 %v1930, %v1947
      %v1959 = vadd.f32 %v1932, %v1951
      %v1960 = vxor.u32 %v1956, 2147483648
      %v1961 = vmul.f32 %v1960, 1.442695
      %v1962 = vpow.pop %v1961
      %v1963 = vadd.f32 %v1962, 1.0
      %v1964 = vrcp.pop %v1963
      %v1965 = vmul.f32 1.0, %v1964
      %v1966 = vxor.u32 %v1957, 2147483648
      %v1967 = vmul.f32 %v1966, 1.442695
      %v1968 = vpow.pop %v1967
      %v1969 = vadd.f32 %v1968, 1.0
      %v1970 = vrcp.pop %v1969
      %v1971 = vmul.f32 1.0, %v1970
      %v1972 = vtanh.pop %v1958
      %v1973 = vxor.u32 %v1959, 2147483648
      %v1974 = vmul.f32 %v1973, 1.442695
      %v1975 = vpow.pop %v1974
      %v1976 = vadd.f32 %v1975, 1.0
      %v1977 = vrcp.pop %v1976
      %v1978 = vmul.f32 1.0, %v1977
      %v1979 = vld [vmem:[#allocation11] sm:$0x3]
      %v1980 = vmul.f32 %v1971, %v1979
      %v1981 = vmul.f32 %v1965, %v1972
      %v1982 = vadd.f32 %v1980, %v1981
      %1983 = vst [vmem:[#allocation11] sm:$0x3] %v1982
      %v1984 = vtanh.pop %v1982
      %v1985 = vmul.f32 %v1978, %v1984
      %1986 = vst [vmem:[#allocation9] sm:$0x3] %v1985
    $region57: #{tpu_custom_call.1} parent=1 // pred_fallthru
      _
    %v1987 = vld [vmem:[#allocation9] sm:$0x3]
    %v1988 = vpack.c.bf16 %v1987, %v1987
    %v1990 = vunpack.c.l.b16 %v1988
    %v1991 = vpack.c.b16 %v1990, %v1990
    %v1992 = vrot.slane %v1991, 5
    %1994 = vst [vmem:[#allocation8] sm:$0x8] %v1992
    // Predicated region
    $region58: #{tpu_custom_call.1} parent=1 // pred_check
      _
    $region59: #{tpu_custom_call.1} parent=1 // pred_check_branch
      %1996 = sbr.rel (0) target = $region61
    $region60: #{tpu_custom_call.1} parent=1 // pred_region
      %s1998 = ssub.s32 64, 64
      %1999 = vsyncadd [#allocation4], %s1998
      %s2001 = sshll.u32 [#allocation8], 4
      %s2002 = int_to_ptr.vmem [resolvable:$true] %s2001
      %2004 = dma.vmem_to_hbm [thread:$0]  %s2002, 64, %s6, [#allocation4]
    $region61: #{tpu_custom_call.1} parent=1 // pred_fallthru
      _
    // Predicated region
    $region62: #{tpu_custom_call.1} parent=1 // pred_check
      _
    $region63: #{tpu_custom_call.1} parent=1 // pred_check_branch
      %2006 = sbr.rel (0) target = $region65
    $region64: #{tpu_custom_call.1} parent=1 // pred_region
      %s2008 = ssub.s32 32, 32
      %2009 = vsyncadd [#allocation10], %s2008
      %s2011 = sshll.u32 [#allocation9], 4
      %s2012 = int_to_ptr.vmem [resolvable:$true] %s2011
      %2014 = dma.vmem_to_hbm [thread:$0]  %s2012, 32, %s7, [#allocation10]
    $region65: #{tpu_custom_call.1} parent=1 // pred_fallthru
      _
    // Predicated region
    $region66: #{tpu_custom_call.1} parent=1 // pred_check
      _
    $region67: #{tpu_custom_call.1} parent=1 // pred_check_branch
      %2016 = sbr.rel (0) target = $region69
    $region68: #{tpu_custom_call.1} parent=1 // pred_region
      %s2018 = ssub.s32 32, 32
      %2019 = vsyncadd [#allocation10], %s2018
      %s2021 = sshll.u32 [#allocation11], 4
      %s2022 = int_to_ptr.vmem [resolvable:$true] %s2021
      %2024 = dma.vmem_to_hbm [thread:$0]  %s2022, 32, %s8, [#allocation10]
    $region69: #{tpu_custom_call.1} parent=1 // pred_fallthru
      _
    // Predicated region
    $region70: #{tpu_custom_call.1} parent=1 // pred_check
      _
    $region71: #{tpu_custom_call.1} parent=1 // pred_check_branch
      %2026 = sbr.rel (0) target = $region73
    $region72: #{tpu_custom_call.1} parent=1 // pred_region
      %2027 = dma.done [#allocation4], 64
    $region73: #{tpu_custom_call.1} parent=1 // pred_fallthru
      _
    // Predicated region
    $region74: #{tpu_custom_call.1} parent=1 // pred_check
      _
    $region75: #{tpu_custom_call.1} parent=1 // pred_check_branch
      %2029 = sbr.rel (0) target = $region77
    $region76: #{tpu_custom_call.1} parent=1 // pred_region
      %2030 = dma.done [#allocation10], 32
    $region77: #{tpu_custom_call.1} parent=1 // pred_fallthru
      _
    // Predicated region
    $region78: #{tpu_custom_call.1} parent=1 // pred_check
      _
    $region79: #{tpu_custom_call.1} parent=1 // pred_check_branch
      %2032 = sbr.rel (0) target = $region81
    $region80: #{tpu_custom_call.1} parent=1 // pred_region
      %2033 = dma.done [#allocation10], 32
    $region81: #{tpu_custom_call.1} parent=1 // pred_fallthru
      _
    %2034 = vsyncpa [#allocation3], 1
    %2035 = vsyncpa [#allocation6], 1
    %2036 = vsyncpa [#allocation4], 1
    %2037 = vsyncpa [#allocation10], 1

</llo_original>
